<compile_context>
chip_gen: v7x
topology: tpu7x:2x2x1
jax: 0.10.0
libtpu: 0.0.40
codegen_flags: <defaults>
</compile_context>

<pallas_src>
import functools

import jax
import jax.numpy as jnp
from jax.experimental import pallas as pl
from jax.experimental.pallas import tpu as pltpu


OUT_PAD = 8  # output lane width (real out_dim is 4; 8 keeps tiling legal while
             # writing 16x less HBM than a 128-lane pad)


def _round_up(x, m):
    return ((x + m - 1) // m) * m


def _default_act_dtype():
    """bf16 tanh only where the VPU/EUP support it (v6e / v7x); f32 elsewhere."""
    try:
        kind = jax.devices()[0].device_kind.lower()
    except Exception:
        return jnp.float32
    return jnp.bfloat16 if ("v6" in kind or "v7" in kind) else jnp.float32


# ----------------------------- kernels --------------------------------------

def _mlp_kernel(x_ref, w_in_ref, b_in_ref, w_hid_ref, b_hid_ref,
                w_out_ref, b_out_ref, o_ref, *, n_hidden, mm_dtype, act_dtype):
    """Plain path: x (TB, 4) -> MLP -> o (TB, OUT_PAD)."""
    x = x_ref[...].astype(mm_dtype)
    h = jnp.tanh(
        (jnp.dot(x, w_in_ref[...], preferred_element_type=jnp.float32)
         + b_in_ref[...]).astype(act_dtype))
    for l in range(n_hidden):                      # static unroll (small depth)
        h = jnp.tanh(
            (jnp.dot(h.astype(mm_dtype), w_hid_ref[l],
                     preferred_element_type=jnp.float32)
             + b_hid_ref[pl.ds(l, 1), :]).astype(act_dtype))
    o_ref[...] = (
        jnp.dot(h.astype(mm_dtype), w_out_ref[...],
                preferred_element_type=jnp.float32)
        + b_out_ref[...]).astype(o_ref.dtype)


def _rff_mlp_kernel(x_ref, rffb_ref, w_cos_ref, w_sin_ref, b_in_ref,
                    w_hid_ref, b_hid_ref, w_out_ref, b_out_ref, o_ref,
                    *, n_hidden, mm_dtype, act_dtype):
    """Fourier-feature path.

    2*pi and the per-dim scales are folded into rffb by the wrapper, and rffb /
    w_cos / w_sin are zero-padded to a lane-dense feature width (cos(0)=1 and
    sin(0)=0 multiply zeroed weight rows, contributing exactly 0).
    """
    # Phase argument stays f32 (bf16 z loses phase accuracy for |z| >> 1).
    z = jnp.dot(x_ref[...], rffb_ref[...], preferred_element_type=jnp.float32)
    cos_z = jnp.cos(z).astype(mm_dtype)
    sin_z = jnp.sin(z).astype(mm_dtype)
    # No lane-axis concat: two MXU matmuls into one f32 accumulator.
    h = jnp.tanh(
        (jnp.dot(cos_z, w_cos_ref[...], preferred_element_type=jnp.float32)
         + jnp.dot(sin_z, w_sin_ref[...], preferred_element_type=jnp.float32)
         + b_in_ref[...]).astype(act_dtype))
    for l in range(n_hidden):
        h = jnp.tanh(
            (jnp.dot(h.astype(mm_dtype), w_hid_ref[l],
                     preferred_element_type=jnp.float32)
             + b_hid_ref[pl.ds(l, 1), :]).astype(act_dtype))
    o_ref[...] = (
        jnp.dot(h.astype(mm_dtype), w_out_ref[...],
                preferred_element_type=jnp.float32)
        + b_out_ref[...]).astype(o_ref.dtype)


# ----------------------------- parameters ------------------------------------

def make_params(key, *, n_layers, n_neurons, fourier_feature=False,
                mapping_size=64, scales=(1.0, 1.0, 1.0, 1.0)):
    """Deterministic (PRNGKey-seeded) parameter construction. Shapes mirror the
    PyTorch module: N_LAYERS linear layers total, N_NEURONS wide. Master f32."""
    in_dim_raw = 4
    out_dim = 4
    n_hidden = n_layers - 2
    in_dim_net = 2 * mapping_size if fourier_feature else in_dim_raw

    keys = jax.random.split(key, 4 + max(n_hidden, 1))

    def glorot(k, shape):
        fan_in, fan_out = shape[-2], shape[-1]
        lim = jnp.sqrt(6.0 / (fan_in + fan_out))
        return jax.random.uniform(k, shape, jnp.float32, -lim, lim)

    params = {
        "w_in": glorot(keys[0], (in_dim_net, n_neurons)),
        "b_in": jnp.zeros((1, n_neurons), jnp.float32),
        "w_hid": (glorot(keys[1], (max(n_hidden, 1), n_neurons, n_neurons))
                  if n_hidden > 0 else
                  jnp.zeros((1, n_neurons, n_neurons), jnp.float32)),
        "b_hid": jnp.zeros((max(n_hidden, 1), n_neurons), jnp.float32),
        "w_out": glorot(keys[2], (n_neurons, out_dim)),
        "b_out": jnp.zeros((1, out_dim), jnp.float32),
        "n_hidden": n_hidden,
    }
    if fourier_feature:
        b = jax.random.normal(keys[3], (in_dim_raw, mapping_size), jnp.float32)
        s = jnp.asarray(scales, jnp.float32).reshape(in_dim_raw, 1)
        params["rff_b"] = s * b   # fold per-dimension scales into B
    return params


# ----------------------------- wrapper ---------------------------------------

def network_forward(x, params, *, fourier_feature=False, tile_b=2048,
                    precise=False):
    """JAX/Pallas equivalent of Network.forward (hardBC=False path).

    precise=True keeps all matmul operands and activations in f32 (useful when
    2nd-order PINN derivatives make bf16 operands too lossy).
    """
    x = x.astype(jnp.float32)          # matches `x = x.float()`
    batch, in_dim_raw = x.shape
    n_hidden = int(params["n_hidden"])
    H = params["w_in"].shape[1]
    out_dim = params["w_out"].shape[1]

    mm_dtype = jnp.float32 if precise else jnp.bfloat16
    act_dtype = jnp.float32 if precise else _default_act_dtype()

    # --- batch tiling --------------------------------------------------------
    # Large tile amortizes per-grid-step overhead; cap it so the batch still
    # splits into >= 2 grid steps (v7x megacore) whenever batch > 128.
    tile = min(tile_b, max(128, _round_up(batch, 128)))
    if pl.cdiv(batch, tile) == 1 and batch > 128:
        tile = max(128, _round_up(pl.cdiv(batch, 2), 128))
    grid_b = pl.cdiv(batch, tile)
    batch_pad = grid_b * tile
    if batch_pad != batch:
        x = jnp.pad(x, ((0, batch_pad - batch), (0, 0)))

    # --- weights: mm_dtype matmul operands, 8-lane padded output -------------
    w_hid = params["w_hid"].astype(mm_dtype)
    b_hid = params["b_hid"]
    b_in = params["b_in"]
    w_out_p = jnp.pad(params["w_out"],
                      ((0, 0), (0, OUT_PAD - out_dim))).astype(mm_dtype)
    b_out_p = jnp.pad(params["b_out"], ((0, 0), (0, OUT_PAD - out_dim)))

    full = lambda a: pl.BlockSpec(a.shape, lambda i, _nd=a.ndim: (0,) * _nd)
    x_spec = pl.BlockSpec((tile, in_dim_raw), lambda i: (i, 0))
    out_spec = pl.BlockSpec((tile, OUT_PAD), lambda i: (i, 0))

    if fourier_feature:
        M = params["rff_b"].shape[1]
        M_pad = _round_up(M, 128)                          # lane-dense features
        rff_b = jnp.pad(2.0 * jnp.pi * params["rff_b"],    # fold 2*pi; stays f32
                        ((0, 0), (0, M_pad - M)))
        w_cos = jnp.pad(params["w_in"][:M, :],
                        ((0, M_pad - M), (0, 0))).astype(mm_dtype)
        w_sin = jnp.pad(params["w_in"][M:, :],
                        ((0, M_pad - M), (0, 0))).astype(mm_dtype)
        kernel = functools.partial(_rff_mlp_kernel, n_hidden=n_hidden,
                                   mm_dtype=mm_dtype, act_dtype=act_dtype)
        args = (x, rff_b, w_cos, w_sin, b_in, w_hid, b_hid, w_out_p, b_out_p)
        flops = 2 * batch_pad * (in_dim_raw * M_pad + 2 * M_pad * H)
        transcendentals = 2 * batch_pad * M_pad
    else:
        w_in = params["w_in"].astype(mm_dtype)
        kernel = functools.partial(_mlp_kernel, n_hidden=n_hidden,
                                   mm_dtype=mm_dtype, act_dtype=act_dtype)
        args = (x, w_in, b_in, w_hid, b_hid, w_out_p, b_out_p)
        flops = 2 * batch_pad * in_dim_raw * H
        transcendentals = 0

    in_specs = [x_spec] + [full(a) for a in args[1:]]
    flops += 2 * batch_pad * (n_hidden * H * H + H * out_dim)
    transcendentals += batch_pad * H * (n_hidden + 1)
    bytes_accessed = int(sum(a.size * a.dtype.itemsize for a in args)
                         + batch_pad * OUT_PAD * 4)

    out_padded = pl.pallas_call(
        kernel,
        out_shape=jax.ShapeDtypeStruct((batch_pad, OUT_PAD), jnp.float32),
        grid=(grid_b,),
        in_specs=in_specs,
        out_specs=out_spec,
        compiler_params=pltpu.CompilerParams(
            dimension_semantics=("parallel",),
            vmem_limit_bytes=32 * 1024 * 1024),
        cost_estimate=pl.CostEstimate(
            flops=int(flops),
            transcendentals=int(transcendentals),
            bytes_accessed=bytes_accessed),
    )(*args)

    # drop batch padding and the lane padding of the output
    return out_padded[:batch, :out_dim]


# ----------------------------- reference -------------------------------------

def _reference_forward(x, params, *, fourier_feature=False):
    x = x.astype(jnp.float32)
    if fourier_feature:
        z = 2.0 * jnp.pi * (x @ params["rff_b"])
        x = jnp.concatenate([jnp.cos(z), jnp.sin(z)], axis=-1)
    h = jnp.tanh(x @ params["w_in"] + params["b_in"])
    for l in range(params["n_hidden"]):
        h = jnp.tanh(h @ params["w_hid"][l] + params["b_hid"][l:l + 1])
    return h @ params["w_out"] + params["b_out"]


# ----------------------------- demo -------------------------------------------

if __name__ == "__main__":
    key = jax.random.PRNGKey(0)
    k_x, k_p1, k_p2 = jax.random.split(key, 3)

    # Small shapes consistent with the module: input is (batch, 4) -> (batch, 4).
    # batch deliberately NOT a multiple of the tile to exercise the padding path
    # and the >=2-grid-step (megacore) cap.
    batch, n_layers, n_neurons, mapping_size = 300, 4, 128, 64
    x = jax.random.normal(k_x, (batch, 4), jnp.float32)

    # Path 1: default config (fourier_feature=False, hardBC=False).
    params_plain = make_params(k_p1, n_layers=n_layers, n_neurons=n_neurons)
    out_plain = network_forward(x, params_plain, fourier_feature=False)
    jax.block_until_ready(out_plain)
    ref_plain = _reference_forward(x, params_plain, fourier_feature=False)
    assert out_plain.shape == (batch, 4)
    # bf16 matmul operands (and bf16 tanh on v6e/v7x) -> loosened tolerance.
    assert jnp.allclose(out_plain, ref_plain, atol=1e-1, rtol=5e-2)

    # Path 1b: f32-precise flag (for derivative-sensitive PINN use).
    out_precise = network_forward(x, params_plain, fourier_feature=False,
                                  precise=True)
    jax.block_until_ready(out_precise)
    assert jnp.allclose(out_precise, ref_plain, atol=1e-4, rtol=1e-4)

    # Path 2: fourier_feature=True (RFF folded into the same fused kernel).
    params_rff = make_params(k_p2, n_layers=n_layers, n_neurons=n_neurons,
                             fourier_feature=True, mapping_size=mapping_size,
                             scales=(1.0, 2.0, 0.5, 1.5))
    out_rff = network_forward(x, params_rff, fourier_feature=True)
    jax.block_until_ready(out_rff)
    ref_rff = _reference_forward(x, params_rff, fourier_feature=True)
    assert out_rff.shape == (batch, 4)
    assert jnp.allclose(out_rff, ref_rff, atol=1e-1, rtol=5e-2)

    print("KERNEL_OK")
</pallas_src>

<mosaic_0001>
module attributes {stable_mosaic.version = 11 : i64} {
  func.func @_mlp_kernel(%arg0: i32, %arg1: memref<256x4xf32, #tpu.memory_space<vmem>>, %arg2: memref<4x128xbf16, #tpu.memory_space<vmem>>, %arg3: memref<1x128xf32, #tpu.memory_space<vmem>>, %arg4: memref<2x128x128xbf16, #tpu.memory_space<vmem>>, %arg5: memref<2x128xf32, #tpu.memory_space<vmem>>, %arg6: memref<128x8xbf16, #tpu.memory_space<vmem>>, %arg7: memref<1x8xf32, #tpu.memory_space<vmem>>, %arg8: memref<256x8xf32, #tpu.memory_space<vmem>>) attributes {dimension_semantics = [#tpu.dimension_semantics<parallel>], iteration_bounds = array<i64: 2>, scalar_prefetch = 0 : i64, scratch_operands = 0 : i64, tpu.core_type = #tpu.core_type<tc>, window_params = [{transform_indices = @transform_0, window_bounds = array<i64: 256, 4>}, {pipeline_mode = #tpu.pipeline_mode<synchronous>, transform_indices = @transform_1, window_bounds = array<i64: 4, 128>}, {pipeline_mode = #tpu.pipeline_mode<synchronous>, transform_indices = @transform_2, window_bounds = array<i64: 1, 128>}, {pipeline_mode = #tpu.pipeline_mode<synchronous>, transform_indices = @transform_3, window_bounds = array<i64: 2, 128, 128>}, {pipeline_mode = #tpu.pipeline_mode<synchronous>, transform_indices = @transform_4, window_bounds = array<i64: 2, 128>}, {pipeline_mode = #tpu.pipeline_mode<synchronous>, transform_indices = @transform_5, window_bounds = array<i64: 128, 8>}, {pipeline_mode = #tpu.pipeline_mode<synchronous>, transform_indices = @transform_6, window_bounds = array<i64: 1, 8>}, {transform_indices = @transform_7, window_bounds = array<i64: 256, 8>}]} {
    %c0 = arith.constant 0 : index
    %c0_0 = arith.constant 0 : index
    %0 = vector.load %arg1[%c0, %c0_0] : memref<256x4xf32, #tpu.memory_space<vmem>>, vector<256x4xf32>
    %1 = arith.truncf %0 : vector<256x4xf32> to vector<256x4xbf16>
    %c0_1 = arith.constant 0 : index
    %c0_2 = arith.constant 0 : index
    %2 = vector.load %arg2[%c0_1, %c0_2] : memref<4x128xbf16, #tpu.memory_space<vmem>>, vector<4x128xbf16>
    %cst = arith.constant dense<0.000000e+00> : vector<256x128xf32>
    %3 = tpu.matmul %1, %2, %cst {dimension_numbers = #tpu.dot_dimension_numbers<[1], [0], [0], [1], [0, 0, 1, 1], [], []>} : vector<256x4xbf16>, vector<4x128xbf16>, vector<256x128xf32> -> vector<256x128xf32>
    %c0_3 = arith.constant 0 : index
    %c0_4 = arith.constant 0 : index
    %4 = vector.load %arg3[%c0_3, %c0_4] : memref<1x128xf32, #tpu.memory_space<vmem>>, vector<1x128xf32>
    %5 = vector.broadcast %4 : vector<1x128xf32> to vector<256x128xf32>
    %6 = arith.addf %3, %5 : vector<256x128xf32>
    %7 = math.tanh %6 : vector<256x128xf32>
    %8 = arith.truncf %7 : vector<256x128xf32> to vector<256x128xbf16>
    %c0_5 = arith.constant 0 : index
    %c0_6 = arith.constant 0 : index
    %c0_7 = arith.constant 0 : index
    %9 = vector.load %arg4[%c0_5, %c0_6, %c0_7] : memref<2x128x128xbf16, #tpu.memory_space<vmem>>, vector<1x128x128xbf16>
    %10 = vector.shape_cast %9 : vector<1x128x128xbf16> to vector<128x128xbf16>
    %cst_8 = arith.constant dense<0.000000e+00> : vector<256x128xf32>
    %11 = tpu.matmul %8, %10, %cst_8 {dimension_numbers = #tpu.dot_dimension_numbers<[1], [0], [0], [1], [0, 0, 1, 1], [], []>} : vector<256x128xbf16>, vector<128x128xbf16>, vector<256x128xf32> -> vector<256x128xf32>
    %c0_9 = arith.constant 0 : index
    %c0_10 = arith.constant 0 : index
    %12 = vector.load %arg5[%c0_9, %c0_10] : memref<2x128xf32, #tpu.memory_space<vmem>>, vector<1x128xf32>
    %13 = vector.broadcast %12 : vector<1x128xf32> to vector<256x128xf32>
    %14 = arith.addf %11, %13 : vector<256x128xf32>
    %15 = math.tanh %14 : vector<256x128xf32>
    %16 = arith.truncf %15 : vector<256x128xf32> to vector<256x128xbf16>
    %c1 = arith.constant 1 : index
    %c0_11 = arith.constant 0 : index
    %c0_12 = arith.constant 0 : index
    %17 = vector.load %arg4[%c1, %c0_11, %c0_12] : memref<2x128x128xbf16, #tpu.memory_space<vmem>>, vector<1x128x128xbf16>
    %18 = vector.shape_cast %17 : vector<1x128x128xbf16> to vector<128x128xbf16>
    %cst_13 = arith.constant dense<0.000000e+00> : vector<256x128xf32>
    %19 = tpu.matmul %16, %18, %cst_13 {dimension_numbers = #tpu.dot_dimension_numbers<[1], [0], [0], [1], [0, 0, 1, 1], [], []>} : vector<256x128xbf16>, vector<128x128xbf16>, vector<256x128xf32> -> vector<256x128xf32>
    %c1_14 = arith.constant 1 : index
    %c0_15 = arith.constant 0 : index
    %20 = vector.load %arg5[%c1_14, %c0_15] : memref<2x128xf32, #tpu.memory_space<vmem>>, vector<1x128xf32>
    %21 = vector.broadcast %20 : vector<1x128xf32> to vector<256x128xf32>
    %22 = arith.addf %19, %21 : vector<256x128xf32>
    %23 = math.tanh %22 : vector<256x128xf32>
    %24 = arith.truncf %23 : vector<256x128xf32> to vector<256x128xbf16>
    %c0_16 = arith.constant 0 : index
    %c0_17 = arith.constant 0 : index
    %25 = vector.load %arg6[%c0_16, %c0_17] : memref<128x8xbf16, #tpu.memory_space<vmem>>, vector<128x8xbf16>
    %cst_18 = arith.constant dense<0.000000e+00> : vector<256x8xf32>
    %26 = tpu.matmul %24, %25, %cst_18 {dimension_numbers = #tpu.dot_dimension_numbers<[1], [0], [0], [1], [0, 0, 1, 1], [], []>} : vector<256x128xbf16>, vector<128x8xbf16>, vector<256x8xf32> -> vector<256x8xf32>
    %c0_19 = arith.constant 0 : index
    %c0_20 = arith.constant 0 : index
    %27 = vector.load %arg7[%c0_19, %c0_20] : memref<1x8xf32, #tpu.memory_space<vmem>>, vector<1x8xf32>
    %28 = vector.broadcast %27 : vector<1x8xf32> to vector<256x8xf32>
    %29 = arith.addf %26, %28 : vector<256x8xf32>
    %c0_21 = arith.constant 0 : index
    %c0_22 = arith.constant 0 : index
    %30 = vector.load %arg8[%c0_21, %c0_22] : memref<256x8xf32, #tpu.memory_space<vmem>>, vector<256x8xf32>
    tpu.vector_store %arg8[%c0_21, %c0_22], %29 {strides = array<i32>} : memref<256x8xf32, #tpu.memory_space<vmem>>, vector<256x8xf32>,
    return
  }
  func.func @transform_0(%arg0: i32) -> (i32, i32) {
    %c0_i32 = arith.constant 0 : i32
    %c0_i32_0 = arith.constant 0 : i32
    return %arg0, %c0_i32 : i32, i32
  }
  func.func @transform_1(%arg0: i32) -> (i32, i32) {
    %c0_i32 = arith.constant 0 : i32
    %c0_i32_0 = arith.constant 0 : i32
    %c0_i32_1 = arith.constant 0 : i32
    return %c0_i32, %c0_i32_0 : i32, i32
  }
  func.func @transform_2(%arg0: i32) -> (i32, i32) {
    %c0_i32 = arith.constant 0 : i32
    %c0_i32_0 = arith.constant 0 : i32
    %c0_i32_1 = arith.constant 0 : i32
    return %c0_i32, %c0_i32_0 : i32, i32
  }
  func.func @transform_3(%arg0: i32) -> (i32, i32, i32) {
    %c0_i32 = arith.constant 0 : i32
    %c0_i32_0 = arith.constant 0 : i32
    %c0_i32_1 = arith.constant 0 : i32
    %c0_i32_2 = arith.constant 0 : i32
    return %c0_i32, %c0_i32_0, %c0_i32_1 : i32, i32, i32
  }
  func.func @transform_4(%arg0: i32) -> (i32, i32) {
    %c0_i32 = arith.constant 0 : i32
    %c0_i32_0 = arith.constant 0 : i32
    %c0_i32_1 = arith.constant 0 : i32
    return %c0_i32, %c0_i32_0 : i32, i32
  }
  func.func @transform_5(%arg0: i32) -> (i32, i32) {
    %c0_i32 = arith.constant 0 : i32
    %c0_i32_0 = arith.constant 0 : i32
    %c0_i32_1 = arith.constant 0 : i32
    return %c0_i32, %c0_i32_0 : i32, i32
  }
  func.func @transform_6(%arg0: i32) -> (i32, i32) {
    %c0_i32 = arith.constant 0 : i32
    %c0_i32_0 = arith.constant 0 : i32
    %c0_i32_1 = arith.constant 0 : i32
    return %c0_i32, %c0_i32_0 : i32, i32
  }
  func.func @transform_7(%arg0: i32) -> (i32, i32) {
    %c0_i32 = arith.constant 0 : i32
    %c0_i32_0 = arith.constant 0 : i32
    return %arg0, %c0_i32 : i32, i32
  }
}

</mosaic_0001>

<llo_original>
// kernel: tpu_custom_call.1
$region0: #{tpu_custom_call.1}
  #allocation0 [shape = 'u32[]', space=smem, size = 0x4, offset = 0x4, fixed_abs, tag = 'smem constant byte address 0x4 - core index']
  #allocation1 [shape = 'u32[144,128]{1,0:T(1,128)}', space=vmem, size = 0x12000, scoped, tag = 'internal scratch']
  %s0 = inlined_call_operand.vmem [shape: f32[512,4], index: 0, kind: input, shape index: {}]
  %s1 = inlined_call_operand.vmem [shape: bf16[4,128], index: 1, kind: input, shape index: {}]
  %s2 = inlined_call_operand.vmem [shape: f32[1,128], index: 2, kind: input, shape index: {}]
  %s3 = inlined_call_operand.vmem [shape: bf16[2,128,128], index: 3, kind: input, shape index: {}]
  %s4 = inlined_call_operand.vmem [shape: f32[2,128], index: 4, kind: input, shape index: {}]
  %s5 = inlined_call_operand.vmem [shape: bf16[128,8], index: 5, kind: input, shape index: {}]
  %s6 = inlined_call_operand.vmem [shape: f32[1,8], index: 6, kind: input, shape index: {}]
  %s7 = inlined_call_operand.vmem [shape: f32[512,8], index: 7, kind: output, shape index: {}]
  %s8 = sld [smem:[#allocation0]]
  $region61: #{tpu_custom_call.1} parent=0
    _
  %s10 = ssub.s32 1, %s8
  %s11 = scalar_select 0, %s10, %s8
  loop: start=0, step=1, limit=4
  $region2: #{tpu_custom_call.1} parent=0 // loop_pre_header
    _
  $region3: #{tpu_custom_call.1} parent=0 // loop_header
    %s13 = sphi 0, %s17
    %p14 = scmp.ge.s32.totalorder %s13, 4
    %s23 = sphi 0, %s25
    %s26 = sphi 0, %s23
    %s27 = sphi 0, %s26
    %s43 = sphi 0, %s27
    %s47 = sphi 0, %s47
    %s49 = sphi 0, %s47
    %s50 = sphi 0, %s49
    %s64 = sphi 0, %s50
    %s68 = sphi 0, %s68
    %s70 = sphi 0, %s68
    %s71 = sphi 0, %s70
    %s85 = sphi 0, %s71
    %s89 = sphi 0, %s89
    %s91 = sphi 0, %s89
    %s92 = sphi 0, %s91
    %s106 = sphi 0, %s92
    %s110 = sphi 0, %s110
    %s112 = sphi 0, %s110
    %s113 = sphi 0, %s112
    %s127 = sphi 0, %s113
    %s131 = sphi 0, %s131
    %s133 = sphi 0, %s131
    %s134 = sphi 0, %s133
    %s148 = sphi 0, %s134
    %s152 = sphi 0, %s152
    %s154 = sphi 0, %s152
    %s155 = sphi 0, %s154
    %s169 = sphi 0, %s155
    %s175 = sphi 0, %s177
    %s178 = sphi 0, %s175
    %s179 = sphi 0, %s178
    %s195 = sphi 0, %s179
  $region4: #{tpu_custom_call.1} parent=0 // loop_header_branch
    %16 = sbr.rel (%p14) target = $region8
  $region5: #{tpu_custom_call.1} parent=0 // loop_body
    %s18 = ssub.s32 %s13, 1
    %s19 = ssub.s32 %s13, 2
    %s20 = sadd.s32 %s13, 1
    %s21 = ssub.s32 %s13, %s20
    %p22 = scmp.eq.s32.totalorder %s21, 0
    %s24 = sadd.s32 %s23, 1
    %s25 = scalar_select %p22, %s23, %s24
    %p28 = pneg %p22
    %p29 = scmp.eq.s32.totalorder %s13, 1
    %p30 = por %p28, %p29
    %p31 = scmp.ne.s32.totalorder %s23, %s26
    %p32 = scmp.eq.s32.totalorder %s13, 0
    %p33 = por %p31, %p32
    %p34 = scmp.ne.s32.totalorder %s23, %s26
    %p35 = scmp.eq.s32.totalorder %s18, 1
    %p36 = por %p34, %p35
    %p37 = scmp.ne.s32.totalorder %s26, %s27
    %p38 = scmp.eq.s32.totalorder %s18, 0
    %p39 = por %p37, %p38
    %p40 = scmp.ne.s32.totalorder %s26, %s27
    %p41 = scmp.eq.s32.totalorder %s19, 1
    %p42 = por %p40, %p41
    %p44 = scmp.ne.s32.totalorder %s27, %s43
    %p45 = scmp.eq.s32.totalorder %s19, 0
    %p46 = por %p44, %p45
    %s48 = sadd.s32 %s47, 1
    %p51 = scmp.eq.s32.totalorder %s13, 1
    %p52 = scmp.ne.s32.totalorder %s47, %s49
    %p53 = scmp.eq.s32.totalorder %s13, 0
    %p54 = por %p52, %p53
    %p55 = scmp.ne.s32.totalorder %s47, %s49
    %p56 = scmp.eq.s32.totalorder %s18, 1
    %p57 = por %p55, %p56
    %p58 = scmp.ne.s32.totalorder %s49, %s50
    %p59 = scmp.eq.s32.totalorder %s18, 0
    %p60 = por %p58, %p59
    %p61 = scmp.ne.s32.totalorder %s49, %s50
    %p62 = scmp.eq.s32.totalorder %s19, 1
    %p63 = por %p61, %p62
    %p65 = scmp.ne.s32.totalorder %s50, %s64
    %p66 = scmp.eq.s32.totalorder %s19, 0
    %p67 = por %p65, %p66
    %s69 = sadd.s32 %s68, 1
    %p72 = scmp.eq.s32.totalorder %s13, 1
    %p73 = scmp.ne.s32.totalorder %s68, %s70
    %p74 = scmp.eq.s32.totalorder %s13, 0
    %p75 = por %p73, %p74
    %p76 = scmp.ne.s32.totalorder %s68, %s70
    %p77 = scmp.eq.s32.totalorder %s18, 1
    %p78 = por %p76, %p77
    %p79 = scmp.ne.s32.totalorder %s70, %s71
    %p80 = scmp.eq.s32.totalorder %s18, 0
    %p81 = por %p79, %p80
    %p82 = scmp.ne.s32.totalorder %s70, %s71
    %p83 = scmp.eq.s32.totalorder %s19, 1
    %p84 = por %p82, %p83
    %p86 = scmp.ne.s32.totalorder %s71, %s85
    %p87 = scmp.eq.s32.totalorder %s19, 0
    %p88 = por %p86, %p87
    %s90 = sadd.s32 %s89, 1
    %p93 = scmp.eq.s32.totalorder %s13, 1
    %p94 = scmp.ne.s32.totalorder %s89, %s91
    %p95 = scmp.eq.s32.totalorder %s13, 0
    %p96 = por %p94, %p95
    %p97 = scmp.ne.s32.totalorder %s89, %s91
    %p98 = scmp.eq.s32.totalorder %s18, 1
    %p99 = por %p97, %p98
    %p100 = scmp.ne.s32.totalorder %s91, %s92
    %p101 = scmp.eq.s32.totalorder %s18, 0
    %p102 = por %p100, %p101
    %p103 = scmp.ne.s32.totalorder %s91, %s92
    %p104 = scmp.eq.s32.totalorder %s19, 1
    %p105 = por %p103, %p104
    %p107 = scmp.ne.s32.totalorder %s92, %s106
    %p108 = scmp.eq.s32.totalorder %s19, 0
    %p109 = por %p107, %p108
    %s111 = sadd.s32 %s110, 1
    %p114 = scmp.eq.s32.totalorder %s13, 1
    %p115 = scmp.ne.s32.totalorder %s110, %s112
    %p116 = scmp.eq.s32.totalorder %s13, 0
    %p117 = por %p115, %p116
    %p118 = scmp.ne.s32.totalorder %s110, %s112
    %p119 = scmp.eq.s32.totalorder %s18, 1
    %p120 = por %p118, %p119
    %p121 = scmp.ne.s32.totalorder %s112, %s113
    %p122 = scmp.eq.s32.totalorder %s18, 0
    %p123 = por %p121, %p122
    %p124 = scmp.ne.s32.totalorder %s112, %s113
    %p125 = scmp.eq.s32.totalorder %s19, 1
    %p126 = por %p124, %p125
    %p128 = scmp.ne.s32.totalorder %s113, %s127
    %p129 = scmp.eq.s32.totalorder %s19, 0
    %p130 = por %p128, %p129
    %s132 = sadd.s32 %s131, 1
    %p135 = scmp.eq.s32.totalorder %s13, 1
    %p136 = scmp.ne.s32.totalorder %s131, %s133
    %p137 = scmp.eq.s32.totalorder %s13, 0
    %p138 = por %p136, %p137
    %p139 = scmp.ne.s32.totalorder %s131, %s133
    %p140 = scmp.eq.s32.totalorder %s18, 1
    %p141 = por %p139, %p140
    %p142 = scmp.ne.s32.totalorder %s133, %s134
    %p143 = scmp.eq.s32.totalorder %s18, 0
    %p144 = por %p142, %p143
    %p145 = scmp.ne.s32.totalorder %s133, %s134
    %p146 = scmp.eq.s32.totalorder %s19, 1
    %p147 = por %p145, %p146
    %p149 = scmp.ne.s32.totalorder %s134, %s148
    %p150 = scmp.eq.s32.totalorder %s19, 0
    %p151 = por %p149, %p150
    %s153 = sadd.s32 %s152, 1
    %p156 = scmp.eq.s32.totalorder %s13, 1
    %p157 = scmp.ne.s32.totalorder %s152, %s154
    %p158 = scmp.eq.s32.totalorder %s13, 0
    %p159 = por %p157, %p158
    %p160 = scmp.ne.s32.totalorder %s152, %s154
    %p161 = scmp.eq.s32.totalorder %s18, 1
    %p162 = por %p160, %p161
    %p163 = scmp.ne.s32.totalorder %s154, %s155
    %p164 = scmp.eq.s32.totalorder %s18, 0
    %p165 = por %p163, %p164
    %p166 = scmp.ne.s32.totalorder %s154, %s155
    %p167 = scmp.eq.s32.totalorder %s19, 1
    %p168 = por %p166, %p167
    %p170 = scmp.ne.s32.totalorder %s155, %s169
    %p171 = scmp.eq.s32.totalorder %s19, 0
    %p172 = por %p170, %p171
    %s173 = ssub.s32 %s13, %s20
    %p174 = scmp.eq.s32.totalorder %s173, 0
    %s176 = sadd.s32 %s175, 1
    %s177 = scalar_select %p174, %s175, %s176
    %p180 = pneg %p174
    %p181 = scmp.eq.s32.totalorder %s13, 1
    %p182 = por %p180, %p181
    %p183 = scmp.ne.s32.totalorder %s175, %s178
    %p184 = scmp.eq.s32.totalorder %s13, 0
    %p185 = por %p183, %p184
    %p186 = scmp.ne.s32.totalorder %s175, %s178
    %p187 = scmp.eq.s32.totalorder %s18, 1
    %p188 = por %p186, %p187
    %p189 = scmp.ne.s32.totalorder %s178, %s179
    %p190 = scmp.eq.s32.totalorder %s18, 0
    %p191 = por %p189, %p190
    %p192 = scmp.ne.s32.totalorder %s178, %s179
    %p193 = scmp.eq.s32.totalorder %s19, 1
    %p194 = por %p192, %p193
    %p196 = scmp.ne.s32.totalorder %s179, %s195
    %p197 = scmp.eq.s32.totalorder %s19, 0
    %p198 = por %p196, %p197
    %p199 = scmp.le.s32.totalorder 1, %s13
    %p200 = scmp.lt.s32.totalorder %s13, 3
    %p201 = pnand %p199, %p200
    %p202 = pneg %p201
    // Predicated region
    $region9: #{tpu_custom_call.1} parent=5 // pred_check
      _
    $region10: #{tpu_custom_call.1} parent=5 // pred_check_branch
      %204 = sbr.rel (%p201) target = $region12
    $region11: #{tpu_custom_call.1} parent=5 // pred_region
      %s205 = ssub.s32 %s13, 1
      // Predicated region
      $region13: #{tpu_custom_call.1} parent=11 // pred_check
        %p206 = pneg %p60
      $region14: #{tpu_custom_call.1} parent=11 // pred_check_branch
        %208 = sbr.rel (%p206) target = $region16
      $region15: #{tpu_custom_call.1} parent=11 // pred_region
        _
      $region16: #{tpu_custom_call.1} parent=11 // pred_fallthru
        _
      // Predicated region
      $region17: #{tpu_custom_call.1} parent=11 // pred_check
        %p209 = pneg %p81
      $region18: #{tpu_custom_call.1} parent=11 // pred_check_branch
        %211 = sbr.rel (%p209) target = $region20
      $region19: #{tpu_custom_call.1} parent=11 // pred_region
        _
      $region20: #{tpu_custom_call.1} parent=11 // pred_fallthru
        _
      // Predicated region
      $region21: #{tpu_custom_call.1} parent=11 // pred_check
        %p212 = pneg %p102
      $region22: #{tpu_custom_call.1} parent=11 // pred_check_branch
        %214 = sbr.rel (%p212) target = $region24
      $region23: #{tpu_custom_call.1} parent=11 // pred_region
        _
      $region24: #{tpu_custom_call.1} parent=11 // pred_fallthru
        _
      // Predicated region
      $region25: #{tpu_custom_call.1} parent=11 // pred_check
        %p215 = pneg %p123
      $region26: #{tpu_custom_call.1} parent=11 // pred_check_branch
        %217 = sbr.rel (%p215) target = $region28
      $region27: #{tpu_custom_call.1} parent=11 // pred_region
        _
      $region28: #{tpu_custom_call.1} parent=11 // pred_fallthru
        _
      // Predicated region
      $region29: #{tpu_custom_call.1} parent=11 // pred_check
        %p218 = pneg %p144
      $region30: #{tpu_custom_call.1} parent=11 // pred_check_branch
        %220 = sbr.rel (%p218) target = $region32
      $region31: #{tpu_custom_call.1} parent=11 // pred_region
        _
      $region32: #{tpu_custom_call.1} parent=11 // pred_fallthru
        _
      // Predicated region
      $region33: #{tpu_custom_call.1} parent=11 // pred_check
        %p221 = pneg %p165
      $region34: #{tpu_custom_call.1} parent=11 // pred_check_branch
        %223 = sbr.rel (%p221) target = $region36
      $region35: #{tpu_custom_call.1} parent=11 // pred_region
        _
      $region36: #{tpu_custom_call.1} parent=11 // pred_fallthru
        _
    $region12: #{tpu_custom_call.1} parent=5 // pred_fallthru
      _
    %p224 = scmp.lt.s32.totalorder %s13, 2
    // Predicated region
    $region37: #{tpu_custom_call.1} parent=5 // pred_check
      %p225 = pneg %p224
    $region38: #{tpu_custom_call.1} parent=5 // pred_check_branch
      %227 = sbr.rel (%p225) target = $region40
    $region39: #{tpu_custom_call.1} parent=5 // pred_region
      // Predicated region
      $region41: #{tpu_custom_call.1} parent=39 // pred_check
        %p228 = pneg %p33
      $region42: #{tpu_custom_call.1} parent=39 // pred_check_branch
        %230 = sbr.rel (%p228) target = $region44
      $region43: #{tpu_custom_call.1} parent=39 // pred_region
        %s231 = smul.u32 32, %s13
        %p232 = scmp.lt.s32.totalorder %s231, 63
        %s233 = scalar_select %p232, %s231, 63
        %s234 = smul.addr %s233, 8
        %s235 = scalar_lea.vmem %s0, %s234
        %s236 = smul.u32 32, %s13
      $region44: #{tpu_custom_call.1} parent=39 // pred_fallthru
        _
    $region40: #{tpu_custom_call.1} parent=5 // pred_fallthru
      _
    %p237 = scmp.le.s32.totalorder 1, %s13
    %p238 = scmp.lt.s32.totalorder %s13, 3
    %p239 = pnand %p237, %p238
    %p240 = pneg %p239
    // Predicated region
    $region45: #{tpu_custom_call.1} parent=5 // pred_check
      _
    $region46: #{tpu_custom_call.1} parent=5 // pred_check_branch
      %242 = sbr.rel (%p239) target = $region48
    $region47: #{tpu_custom_call.1} parent=5 // pred_region
      %s243 = ssub.s32 %s13, 1
      %s244 = smul.u32 32, %s18
      %p245 = scmp.lt.s32.totalorder %s244, 63
      %s246 = scalar_select %p245, %s244, 63
      %s247 = smul.addr %s246, 8
      %s248 = scalar_lea.vmem %s0, %s247
      %p249 = pneg %p39
      %p250 = pneg %p36
      %p251 = pneg %p60
      %p252 = pneg %p57
      %p253 = pneg %p81
      %p254 = pneg %p78
      %p255 = pneg %p102
      %p256 = pneg %p99
      %p257 = pneg %p123
      %p258 = pneg %p120
      %p259 = pneg %p144
      %p260 = pneg %p141
      %p261 = pneg %p165
      %p262 = pneg %p162
      %p263 = pneg %p191
      %p264 = pneg %p188
      %s265 = smul.u32 32, %s18
      %p266 = scmp.lt.s32.totalorder %s265, 63
      %s267 = scalar_select %p266, %s265, 63
      %s268 = smul.addr %s267, 8
      %s269 = scalar_lea.vmem %s7, %s268
      %s270 = smul.u32 32, %s18
      %p271 = scmp.lt.s32.totalorder %s270, 63
      %s272 = scalar_select %p271, %s270, 63
      %s273 = smul.addr %s272, 8
      %s274 = scalar_lea.vmem %s0, %s273
      %s275 = smul.u32 32, %s18
      %s276 = smul.u32 32, %s18
      %p277 = scmp.lt.s32.totalorder %s276, 63
      %s278 = scalar_select %p277, %s276, 63
      %s279 = smul.addr %s278, 8
      %s280 = scalar_lea.vmem %s7, %s279
      %s281 = smul.u32 32, %s18
      %v283 = vld [vmem:[%s274] sm:$0xff]
      %v284 = vld [vmem:[%s274 + $0x8] sm:$0xff]
      %v285 = vld [vmem:[%s274 + $0x10] sm:$0xff]
      %v286 = vld [vmem:[%s274 + $0x18] sm:$0xff]
      %v287 = vld [vmem:[%s274 + $0x20] sm:$0xff]
      %v288 = vld [vmem:[%s274 + $0x28] sm:$0xff]
      %v289 = vld [vmem:[%s274 + $0x30] sm:$0xff]
      %v290 = vld [vmem:[%s274 + $0x38] sm:$0xff]
      %v291 = vld [vmem:[%s274 + $0x40] sm:$0xff]
      %v292 = vld [vmem:[%s274 + $0x48] sm:$0xff]
      %v293 = vld [vmem:[%s274 + $0x50] sm:$0xff]
      %v294 = vld [vmem:[%s274 + $0x58] sm:$0xff]
      %v295 = vld [vmem:[%s274 + $0x60] sm:$0xff]
      %v296 = vld [vmem:[%s274 + $0x68] sm:$0xff]
      %v297 = vld [vmem:[%s274 + $0x70] sm:$0xff]
      %v298 = vld [vmem:[%s274 + $0x78] sm:$0xff]
      %v299 = vld [vmem:[%s274 + $0x80] sm:$0xff]
      %v300 = vld [vmem:[%s274 + $0x88] sm:$0xff]
      %v301 = vld [vmem:[%s274 + $0x90] sm:$0xff]
      %v302 = vld [vmem:[%s274 + $0x98] sm:$0xff]
      %v303 = vld [vmem:[%s274 + $0xa0] sm:$0xff]
      %v304 = vld [vmem:[%s274 + $0xa8] sm:$0xff]
      %v305 = vld [vmem:[%s274 + $0xb0] sm:$0xff]
      %v306 = vld [vmem:[%s274 + $0xb8] sm:$0xff]
      %v307 = vld [vmem:[%s274 + $0xc0] sm:$0xff]
      %v308 = vld [vmem:[%s274 + $0xc8] sm:$0xff]
      %v309 = vld [vmem:[%s274 + $0xd0] sm:$0xff]
      %v310 = vld [vmem:[%s274 + $0xd8] sm:$0xff]
      %v311 = vld [vmem:[%s274 + $0xe0] sm:$0xff]
      %v312 = vld [vmem:[%s274 + $0xe8] sm:$0xff]
      %v313 = vld [vmem:[%s274 + $0xf0] sm:$0xff]
      %v314 = vld [vmem:[%s274 + $0xf8] sm:$0xff]
      %v315 = vpack.c.bf16 %v284, %v283
      %v316 = vpack.c.bf16 %v286, %v285
      %v317 = vpack.c.bf16 %v288, %v287
      %v318 = vpack.c.bf16 %v290, %v289
      %v319 = vpack.c.bf16 %v292, %v291
      %v320 = vpack.c.bf16 %v294, %v293
      %v321 = vpack.c.bf16 %v296, %v295
      %v322 = vpack.c.bf16 %v298, %v297
      %v323 = vpack.c.bf16 %v300, %v299
      %v324 = vpack.c.bf16 %v302, %v301
      %v325 = vpack.c.bf16 %v304, %v303
      %v326 = vpack.c.bf16 %v306, %v305
      %v327 = vpack.c.bf16 %v308, %v307
      %v328 = vpack.c.bf16 %v310, %v309
      %v329 = vpack.c.bf16 %v312, %v311
      %v330 = vpack.c.bf16 %v314, %v313
      %v331 = vld [vmem:[%s1] sm:$0x3]
      %v332 = vld [vmem:[%s2] sm:$0x1]
      %v334 = vlaneseq
      %v335 = vshrl.u32 %v334, 7
      %v336 = vsub.s32 0, %v335
      %v337 = vrot.slane %v332, %v336
      %vm339 = vcmask 31744
      %v341 = vsel %vm339, %v315, 0
      %v344 = vsel %vm339, %v316, 0
      %v347 = vsel %vm339, %v317, 0
      %v350 = vsel %vm339, %v318, 0
      %v353 = vsel %vm339, %v319, 0
      %v356 = vsel %vm339, %v320, 0
      %v359 = vsel %vm339, %v321, 0
      %v362 = vsel %vm339, %v322, 0
      %v365 = vsel %vm339, %v323, 0
      %v368 = vsel %vm339, %v324, 0
      %v371 = vsel %vm339, %v325, 0
      %v374 = vsel %vm339, %v326, 0
      %v377 = vsel %vm339, %v327, 0
      %v380 = vsel %vm339, %v328, 0
      %v383 = vsel %vm339, %v329, 0
      %v386 = vsel %vm339, %v330, 0
      %vm388 = vcmask 1041408
      %v390 = vsel %vm388, %v331, 0
      %392 = vmatprep.subr.bf16.mxu0 0
      %393 = vmatpush1.bf16.msra.mxu0 %v390
      %394 = vmatprep.subr.bf16.mxu0 0
      %395 = vmatpush1.bf16.msra.mxu0 0
      %396 = vmatprep.subr.bf16.mxu0 0
      %397 = vmatpush1.bf16.msra.mxu0 0
      %398 = vmatprep.subr.bf16.mxu0 0
      %399 = vmatpush1.bf16.msra.mxu0 0
      %400 = vmatprep.subr.bf16.mxu0 0
      %401 = vmatpush1.bf16.msra.mxu0 0
      %402 = vmatprep.subr.bf16.mxu0 0
      %403 = vmatpush1.bf16.msra.mxu0 0
      %404 = vmatprep.subr.bf16.mxu0 0
      %405 = vmatpush1.bf16.msra.mxu0 0
      %406 = vmatprep.subr.bf16.mxu0 0
      %407 = vmatpush1.bf16.msra.mxu0 0
      %408 = vmatprep.subr.bf16.mxu0 0
      %409 = vmatpush1.bf16.msra.mxu0 0
      %410 = vmatprep.subr.bf16.mxu0 0
      %411 = vmatpush1.bf16.msra.mxu0 0
      %412 = vmatprep.subr.bf16.mxu0 0
      %413 = vmatpush1.bf16.msra.mxu0 0
      %414 = vmatprep.subr.bf16.mxu0 0
      %415 = vmatpush1.bf16.msra.mxu0 0
      %416 = vmatprep.subr.bf16.mxu0 0
      %417 = vmatpush1.bf16.msra.mxu0 0
      %418 = vmatprep.subr.bf16.mxu0 0
      %419 = vmatpush1.bf16.msra.mxu0 0
      %420 = vmatprep.subr.bf16.mxu0 0
      %421 = vmatpush1.bf16.msra.mxu0 0
      %422 = vmatprep.subr.bf16.mxu0 0
      %423 = vmatpush1.bf16.msra.mxu0 0
      %424 = vmatprep.mubr.bf16.mxu0 0
      %425 = vmatmul.mubr.bf16.gmra.mrb[0].mxu0 %v341
      %v426 = vpop.f32.mrb[0].mxu0
      %v427 = vadd.f32 %v337, %v426
      %v428 = vpop.f32.mrb[0].mxu0
      %v429 = vpop.f32.mrb[0].mxu0
      %v430 = vadd.f32 %v337, %v429
      %v431 = vpop.f32.mrb[0].mxu0
      %432 = vmatprep.mubr.bf16.mxu0 0
      %433 = vmatmul.mubr.bf16.gmra.mrb[0].mxu0 %v344
      %v434 = vpop.f32.mrb[0].mxu0
      %v435 = vadd.f32 %v337, %v434
      %v436 = vpop.f32.mrb[0].mxu0
      %v437 = vpop.f32.mrb[0].mxu0
      %v438 = vadd.f32 %v337, %v437
      %v439 = vpop.f32.mrb[0].mxu0
      %440 = vmatprep.mubr.bf16.mxu0 0
      %441 = vmatmul.mubr.bf16.gmra.mrb[0].mxu0 %v347
      %v442 = vpop.f32.mrb[0].mxu0
      %v443 = vadd.f32 %v337, %v442
      %v444 = vpop.f32.mrb[0].mxu0
      %v445 = vpop.f32.mrb[0].mxu0
      %v446 = vadd.f32 %v337, %v445
      %v447 = vpop.f32.mrb[0].mxu0
      %448 = vmatprep.mubr.bf16.mxu0 0
      %449 = vmatmul.mubr.bf16.gmra.mrb[0].mxu0 %v350
      %v450 = vpop.f32.mrb[0].mxu0
      %v451 = vadd.f32 %v337, %v450
      %v452 = vpop.f32.mrb[0].mxu0
      %v453 = vpop.f32.mrb[0].mxu0
      %v454 = vadd.f32 %v337, %v453
      %v455 = vpop.f32.mrb[0].mxu0
      %456 = vmatprep.mubr.bf16.mxu0 0
      %457 = vmatmul.mubr.bf16.gmra.mrb[0].mxu0 %v353
      %v458 = vpop.f32.mrb[0].mxu0
      %v459 = vadd.f32 %v337, %v458
      %v460 = vpop.f32.mrb[0].mxu0
      %v461 = vpop.f32.mrb[0].mxu0
      %v462 = vadd.f32 %v337, %v461
      %v463 = vpop.f32.mrb[0].mxu0
      %464 = vmatprep.mubr.bf16.mxu0 0
      %465 = vmatmul.mubr.bf16.gmra.mrb[0].mxu0 %v356
      %v466 = vpop.f32.mrb[0].mxu0
      %v467 = vadd.f32 %v337, %v466
      %v468 = vpop.f32.mrb[0].mxu0
      %v469 = vpop.f32.mrb[0].mxu0
      %v470 = vadd.f32 %v337, %v469
      %v471 = vpop.f32.mrb[0].mxu0
      %472 = vmatprep.mubr.bf16.mxu0 0
      %473 = vmatmul.mubr.bf16.gmra.mrb[0].mxu0 %v359
      %v474 = vpop.f32.mrb[0].mxu0
      %v475 = vadd.f32 %v337, %v474
      %v476 = vpop.f32.mrb[0].mxu0
      %v477 = vpop.f32.mrb[0].mxu0
      %v478 = vadd.f32 %v337, %v477
      %v479 = vpop.f32.mrb[0].mxu0
      %480 = vmatprep.mubr.bf16.mxu0 0
      %481 = vmatmul.mubr.bf16.gmra.mrb[0].mxu0 %v362
      %v482 = vpop.f32.mrb[0].mxu0
      %v483 = vadd.f32 %v337, %v482
      %v484 = vpop.f32.mrb[0].mxu0
      %v485 = vpop.f32.mrb[0].mxu0
      %v486 = vadd.f32 %v337, %v485
      %v487 = vpop.f32.mrb[0].mxu0
      %488 = vmatprep.mubr.bf16.mxu0 0
      %489 = vmatmul.mubr.bf16.gmra.mrb[0].mxu0 %v365
      %v490 = vpop.f32.mrb[0].mxu0
      %v491 = vadd.f32 %v337, %v490
      %v492 = vpop.f32.mrb[0].mxu0
      %v493 = vpop.f32.mrb[0].mxu0
      %v494 = vadd.f32 %v337, %v493
      %v495 = vpop.f32.mrb[0].mxu0
      %496 = vmatprep.mubr.bf16.mxu0 0
      %497 = vmatmul.mubr.bf16.gmra.mrb[0].mxu0 %v368
      %v498 = vpop.f32.mrb[0].mxu0
      %v499 = vadd.f32 %v337, %v498
      %v500 = vpop.f32.mrb[0].mxu0
      %v501 = vpop.f32.mrb[0].mxu0
      %v502 = vadd.f32 %v337, %v501
      %v503 = vpop.f32.mrb[0].mxu0
      %504 = vmatprep.mubr.bf16.mxu0 0
      %505 = vmatmul.mubr.bf16.gmra.mrb[0].mxu0 %v371
      %v506 = vpop.f32.mrb[0].mxu0
      %v507 = vadd.f32 %v337, %v506
      %v508 = vpop.f32.mrb[0].mxu0
      %v509 = vpop.f32.mrb[0].mxu0
      %v510 = vadd.f32 %v337, %v509
      %v511 = vpop.f32.mrb[0].mxu0
      %512 = vmatprep.mubr.bf16.mxu0 0
      %513 = vmatmul.mubr.bf16.gmra.mrb[0].mxu0 %v374
      %v514 = vpop.f32.mrb[0].mxu0
      %v515 = vadd.f32 %v337, %v514
      %v516 = vpop.f32.mrb[0].mxu0
      %v517 = vpop.f32.mrb[0].mxu0
      %v518 = vadd.f32 %v337, %v517
      %v519 = vpop.f32.mrb[0].mxu0
      %520 = vmatprep.mubr.bf16.mxu0 0
      %521 = vmatmul.mubr.bf16.gmra.mrb[0].mxu0 %v377
      %v522 = vpop.f32.mrb[0].mxu0
      %v523 = vadd.f32 %v337, %v522
      %v524 = vpop.f32.mrb[0].mxu0
      %v525 = vpop.f32.mrb[0].mxu0
      %v526 = vadd.f32 %v337, %v525
      %v527 = vpop.f32.mrb[0].mxu0
      %528 = vmatprep.mubr.bf16.mxu0 0
      %529 = vmatmul.mubr.bf16.gmra.mrb[0].mxu0 %v380
      %v530 = vpop.f32.mrb[0].mxu0
      %v531 = vadd.f32 %v337, %v530
      %v532 = vpop.f32.mrb[0].mxu0
      %v533 = vpop.f32.mrb[0].mxu0
      %v534 = vadd.f32 %v337, %v533
      %v535 = vpop.f32.mrb[0].mxu0
      %536 = vmatprep.mubr.bf16.mxu0 0
      %537 = vmatmul.mubr.bf16.gmra.mrb[0].mxu0 %v383
      %v538 = vpop.f32.mrb[0].mxu0
      %v539 = vadd.f32 %v337, %v538
      %v540 = vpop.f32.mrb[0].mxu0
      %v541 = vpop.f32.mrb[0].mxu0
      %v542 = vadd.f32 %v337, %v541
      %v543 = vpop.f32.mrb[0].mxu0
      %544 = vmatprep.mubr.bf16.mxu0 0
      %545 = vmatmul.mubr.bf16.gmra.mrb[0].mxu0 %v386
      %v546 = vpop.f32.mrb[0].mxu0
      %v547 = vadd.f32 %v337, %v546
      %v548 = vpop.f32.mrb[0].mxu0
      %v549 = vpop.f32.mrb[0].mxu0
      %v550 = vadd.f32 %v337, %v549
      %v551 = vpop.f32.mrb[0].mxu0
      %552 = vdwg.mxu0
      %v553 = vtanh.pop %v427
      %v554 = vtanh.pop %v430
      %v555 = vtanh.pop %v435
      %v556 = vtanh.pop %v438
      %v557 = vtanh.pop %v443
      %v558 = vtanh.pop %v446
      %v559 = vtanh.pop %v451
      %v560 = vtanh.pop %v454
      %v561 = vtanh.pop %v459
      %v562 = vtanh.pop %v462
      %v563 = vtanh.pop %v467
      %v564 = vtanh.pop %v470
      %v565 = vtanh.pop %v475
      %v566 = vtanh.pop %v478
      %v567 = vtanh.pop %v483
      %v568 = vtanh.pop %v486
      %v569 = vtanh.pop %v491
      %v570 = vtanh.pop %v494
      %v571 = vtanh.pop %v499
      %v572 = vtanh.pop %v502
      %v573 = vtanh.pop %v507
      %v574 = vtanh.pop %v510
      %v575 = vtanh.pop %v515
      %v576 = vtanh.pop %v518
      %v577 = vtanh.pop %v523
      %v578 = vtanh.pop %v526
      %v579 = vtanh.pop %v531
      %v580 = vtanh.pop %v534
      %v581 = vtanh.pop %v539
      %v582 = vtanh.pop %v542
      %v583 = vtanh.pop %v547
      %v584 = vtanh.pop %v550
      %v585 = vpack.c.bf16 %v554, %v553
      %v586 = vpack.c.bf16 %v556, %v555
      %v587 = vpack.c.bf16 %v558, %v557
      %v588 = vpack.c.bf16 %v560, %v559
      %v589 = vpack.c.bf16 %v562, %v561
      %v590 = vpack.c.bf16 %v564, %v563
      %v591 = vpack.c.bf16 %v566, %v565
      %v592 = vpack.c.bf16 %v568, %v567
      %v593 = vpack.c.bf16 %v570, %v569
      %v594 = vpack.c.bf16 %v572, %v571
      %v595 = vpack.c.bf16 %v574, %v573
      %v596 = vpack.c.bf16 %v576, %v575
      %v597 = vpack.c.bf16 %v578, %v577
      %v598 = vpack.c.bf16 %v580, %v579
      %v599 = vpack.c.bf16 %v582, %v581
      %v600 = vpack.c.bf16 %v584, %v583
      %v601 = vld [vmem:[%s3] sm:$0xf]
      %v602 = vld [vmem:[%s3 + $0x4] sm:$0xf]
      %v603 = vld [vmem:[%s3 + $0x8] sm:$0xf]
      %v604 = vld [vmem:[%s3 + $0xc] sm:$0xf]
      %v605 = vld [vmem:[%s3 + $0x10] sm:$0xf]
      %v606 = vld [vmem:[%s3 + $0x14] sm:$0xf]
      %v607 = vld [vmem:[%s3 + $0x18] sm:$0xf]
      %v608 = vld [vmem:[%s3 + $0x1c] sm:$0xf]
      %v609 = vld [vmem:[%s3 + $0x20] sm:$0xf]
      %v610 = vld [vmem:[%s3 + $0x24] sm:$0xf]
      %v611 = vld [vmem:[%s3 + $0x28] sm:$0xf]
      %v612 = vld [vmem:[%s3 + $0x2c] sm:$0xf]
      %v613 = vld [vmem:[%s3 + $0x30] sm:$0xf]
      %v614 = vld [vmem:[%s3 + $0x34] sm:$0xf]
      %v615 = vld [vmem:[%s3 + $0x38] sm:$0xf]
      %v616 = vld [vmem:[%s3 + $0x3c] sm:$0xf]
      %v617 = vld [vmem:[%s4] sm:$0x1]
      %v618 = vlaneseq
      %v619 = vshrl.u32 %v618, 7
      %v620 = vsub.s32 0, %v619
      %v621 = vrot.slane %v617, %v620
      %v638 = vunpack.c.l.b16 %v601
      %v639 = vunpack.c.l.b16 %v602
      %v640 = vunpack.c.l.b16 %v603
      %v641 = vunpack.c.l.b16 %v604
      %v642 = vunpack.c.l.b16 %v605
      %v643 = vunpack.c.l.b16 %v606
      %v644 = vunpack.c.l.b16 %v607
      %v645 = vunpack.c.l.b16 %v608
      %v646 = vunpack.c.l.b16 %v609
      %v647 = vunpack.c.l.b16 %v610
      %v648 = vunpack.c.l.b16 %v611
      %v649 = vunpack.c.l.b16 %v612
      %v650 = vunpack.c.l.b16 %v613
      %v651 = vunpack.c.l.b16 %v614
      %v652 = vunpack.c.l.b16 %v615
      %v653 = vunpack.c.l.b16 %v616
      %v654 = vpack.c.b16 %v639, %v638
      %v655 = vpack.c.b16 %v641, %v640
      %v656 = vpack.c.b16 %v643, %v642
      %v657 = vpack.c.b16 %v645, %v644
      %v658 = vpack.c.b16 %v647, %v646
      %v659 = vpack.c.b16 %v649, %v648
      %v660 = vpack.c.b16 %v651, %v650
      %v661 = vpack.c.b16 %v653, %v652
      %670 = vmatprep.subr.bf16.mxu0 0
      %671 = vmatpush1.bf16.msra.mxu0 %v654
      %672 = vmatprep.subr.bf16.mxu0 0
      %673 = vmatpush1.bf16.msra.mxu0 %v655
      %674 = vmatprep.subr.bf16.mxu0 0
      %675 = vmatpush1.bf16.msra.mxu0 %v656
      %676 = vmatprep.subr.bf16.mxu0 0
      %677 = vmatpush1.bf16.msra.mxu0 %v657
      %678 = vmatprep.subr.bf16.mxu0 0
      %679 = vmatpush1.bf16.msra.mxu0 %v658
      %680 = vmatprep.subr.bf16.mxu0 0
      %681 = vmatpush1.bf16.msra.mxu0 %v659
      %682 = vmatprep.subr.bf16.mxu0 0
      %683 = vmatpush1.bf16.msra.mxu0 %v660
      %684 = vmatprep.subr.bf16.mxu0 0
      %685 = vmatpush1.bf16.msra.mxu0 %v661
      %686 = vmatprep.subr.bf16.mxu0 0
      %687 = vmatpush1.bf16.msra.mxu0 0
      %688 = vmatprep.subr.bf16.mxu0 0
      %689 = vmatpush1.bf16.msra.mxu0 0
      %690 = vmatprep.subr.bf16.mxu0 0
      %691 = vmatpush1.bf16.msra.mxu0 0
      %692 = vmatprep.subr.bf16.mxu0 0
      %693 = vmatpush1.bf16.msra.mxu0 0
      %694 = vmatprep.subr.bf16.mxu0 0
      %695 = vmatpush1.bf16.msra.mxu0 0
      %696 = vmatprep.subr.bf16.mxu0 0
      %697 = vmatpush1.bf16.msra.mxu0 0
      %698 = vmatprep.subr.bf16.mxu0 0
      %699 = vmatpush1.bf16.msra.mxu0 0
      %700 = vmatprep.subr.bf16.mxu0 0
      %701 = vmatpush1.bf16.msra.mxu0 0
      %702 = vmatprep.mubr.bf16.mxu0 0
      %703 = vmatmul.mubr.bf16.gmra.mrb[0].mxu0 %v585
      %v704 = vpop.f32.mrb[0].mxu0
      %v705 = vadd.f32 %v621, %v704
      %v706 = vpop.f32.mrb[0].mxu0
      %v707 = vpop.f32.mrb[0].mxu0
      %v708 = vadd.f32 %v621, %v707
      %v709 = vpop.f32.mrb[0].mxu0
      %710 = vmatprep.mubr.bf16.mxu0 0
      %711 = vmatmul.mubr.bf16.gmra.mrb[0].mxu0 %v586
      %v712 = vpop.f32.mrb[0].mxu0
      %v713 = vadd.f32 %v621, %v712
      %v714 = vpop.f32.mrb[0].mxu0
      %v715 = vpop.f32.mrb[0].mxu0
      %v716 = vadd.f32 %v621, %v715
      %v717 = vpop.f32.mrb[0].mxu0
      %718 = vmatprep.mubr.bf16.mxu0 0
      %719 = vmatmul.mubr.bf16.gmra.mrb[0].mxu0 %v587
      %v720 = vpop.f32.mrb[0].mxu0
      %v721 = vadd.f32 %v621, %v720
      %v722 = vpop.f32.mrb[0].mxu0
      %v723 = vpop.f32.mrb[0].mxu0
      %v724 = vadd.f32 %v621, %v723
      %v725 = vpop.f32.mrb[0].mxu0
      %726 = vmatprep.mubr.bf16.mxu0 0
      %727 = vmatmul.mubr.bf16.gmra.mrb[0].mxu0 %v588
      %v728 = vpop.f32.mrb[0].mxu0
      %v729 = vadd.f32 %v621, %v728
      %v730 = vpop.f32.mrb[0].mxu0
      %v731 = vpop.f32.mrb[0].mxu0
      %v732 = vadd.f32 %v621, %v731
      %v733 = vpop.f32.mrb[0].mxu0
      %734 = vmatprep.mubr.bf16.mxu0 0
      %735 = vmatmul.mubr.bf16.gmra.mrb[0].mxu0 %v589
      %v736 = vpop.f32.mrb[0].mxu0
      %v737 = vadd.f32 %v621, %v736
      %v738 = vpop.f32.mrb[0].mxu0
      %v739 = vpop.f32.mrb[0].mxu0
      %v740 = vadd.f32 %v621, %v739
      %v741 = vpop.f32.mrb[0].mxu0
      %742 = vmatprep.mubr.bf16.mxu0 0
      %743 = vmatmul.mubr.bf16.gmra.mrb[0].mxu0 %v590
      %v744 = vpop.f32.mrb[0].mxu0
      %v745 = vadd.f32 %v621, %v744
      %v746 = vpop.f32.mrb[0].mxu0
      %v747 = vpop.f32.mrb[0].mxu0
      %v748 = vadd.f32 %v621, %v747
      %v749 = vpop.f32.mrb[0].mxu0
      %750 = vmatprep.mubr.bf16.mxu0 0
      %751 = vmatmul.mubr.bf16.gmra.mrb[0].mxu0 %v591
      %v752 = vpop.f32.mrb[0].mxu0
      %v753 = vadd.f32 %v621, %v752
      %v754 = vpop.f32.mrb[0].mxu0
      %v755 = vpop.f32.mrb[0].mxu0
      %v756 = vadd.f32 %v621, %v755
      %v757 = vpop.f32.mrb[0].mxu0
      %758 = vmatprep.mubr.bf16.mxu0 0
      %759 = vmatmul.mubr.bf16.gmra.mrb[0].mxu0 %v592
      %v760 = vpop.f32.mrb[0].mxu0
      %v761 = vadd.f32 %v621, %v760
      %v762 = vpop.f32.mrb[0].mxu0
      %v763 = vpop.f32.mrb[0].mxu0
      %v764 = vadd.f32 %v621, %v763
      %v765 = vpop.f32.mrb[0].mxu0
      %766 = vmatprep.mubr.bf16.mxu0 0
      %767 = vmatmul.mubr.bf16.gmra.mrb[0].mxu0 %v593
      %v768 = vpop.f32.mrb[0].mxu0
      %v769 = vadd.f32 %v621, %v768
      %v770 = vpop.f32.mrb[0].mxu0
      %v771 = vpop.f32.mrb[0].mxu0
      %v772 = vadd.f32 %v621, %v771
      %v773 = vpop.f32.mrb[0].mxu0
      %774 = vmatprep.mubr.bf16.mxu0 0
      %775 = vmatmul.mubr.bf16.gmra.mrb[0].mxu0 %v594
      %v776 = vpop.f32.mrb[0].mxu0
      %v777 = vadd.f32 %v621, %v776
      %v778 = vpop.f32.mrb[0].mxu0
      %v779 = vpop.f32.mrb[0].mxu0
      %v780 = vadd.f32 %v621, %v779
      %v781 = vpop.f32.mrb[0].mxu0
      %782 = vmatprep.mubr.bf16.mxu0 0
      %783 = vmatmul.mubr.bf16.gmra.mrb[0].mxu0 %v595
      %v784 = vpop.f32.mrb[0].mxu0
      %v785 = vadd.f32 %v621, %v784
      %v786 = vpop.f32.mrb[0].mxu0
      %v787 = vpop.f32.mrb[0].mxu0
      %v788 = vadd.f32 %v621, %v787
      %v789 = vpop.f32.mrb[0].mxu0
      %790 = vmatprep.mubr.bf16.mxu0 0
      %791 = vmatmul.mubr.bf16.gmra.mrb[0].mxu0 %v596
      %v792 = vpop.f32.mrb[0].mxu0
      %v793 = vadd.f32 %v621, %v792
      %v794 = vpop.f32.mrb[0].mxu0
      %v795 = vpop.f32.mrb[0].mxu0
      %v796 = vadd.f32 %v621, %v795
      %v797 = vpop.f32.mrb[0].mxu0
      %798 = vmatprep.mubr.bf16.mxu0 0
      %799 = vmatmul.mubr.bf16.gmra.mrb[0].mxu0 %v597
      %v800 = vpop.f32.mrb[0].mxu0
      %v801 = vadd.f32 %v621, %v800
      %v802 = vpop.f32.mrb[0].mxu0
      %v803 = vpop.f32.mrb[0].mxu0
      %v804 = vadd.f32 %v621, %v803
      %v805 = vpop.f32.mrb[0].mxu0
      %806 = vmatprep.mubr.bf16.mxu0 0
      %807 = vmatmul.mubr.bf16.gmra.mrb[0].mxu0 %v598
      %v808 = vpop.f32.mrb[0].mxu0
      %v809 = vadd.f32 %v621, %v808
      %v810 = vpop.f32.mrb[0].mxu0
      %v811 = vpop.f32.mrb[0].mxu0
      %v812 = vadd.f32 %v621, %v811
      %v813 = vpop.f32.mrb[0].mxu0
      %814 = vmatprep.mubr.bf16.mxu0 0
      %815 = vmatmul.mubr.bf16.gmra.mrb[0].mxu0 %v599
      %v816 = vpop.f32.mrb[0].mxu0
      %v817 = vadd.f32 %v621, %v816
      %v818 = vpop.f32.mrb[0].mxu0
      %v819 = vpop.f32.mrb[0].mxu0
      %v820 = vadd.f32 %v621, %v819
      %v821 = vpop.f32.mrb[0].mxu0
      %822 = vmatprep.mubr.bf16.mxu0 0
      %823 = vmatmul.mubr.bf16.gmra.mrb[0].mxu0 %v600
      %v824 = vpop.f32.mrb[0].mxu0
      %v825 = vadd.f32 %v621, %v824
      %v826 = vpop.f32.mrb[0].mxu0
      %v827 = vpop.f32.mrb[0].mxu0
      %v828 = vadd.f32 %v621, %v827
      %v829 = vpop.f32.mrb[0].mxu0
      %830 = vdwg.mxu0
      %v831 = vtanh.pop %v705
      %v832 = vtanh.pop %v708
      %v833 = vtanh.pop %v713
      %v834 = vtanh.pop %v716
      %v835 = vtanh.pop %v721
      %v836 = vtanh.pop %v724
      %v837 = vtanh.pop %v729
      %v838 = vtanh.pop %v732
      %v839 = vtanh.pop %v737
      %v840 = vtanh.pop %v740
      %v841 = vtanh.pop %v745
      %v842 = vtanh.pop %v748
      %v843 = vtanh.pop %v753
      %v844 = vtanh.pop %v756
      %v845 = vtanh.pop %v761
      %v846 = vtanh.pop %v764
      %v847 = vtanh.pop %v769
      %v848 = vtanh.pop %v772
      %v849 = vtanh.pop %v777
      %v850 = vtanh.pop %v780
      %v851 = vtanh.pop %v785
      %v852 = vtanh.pop %v788
      %v853 = vtanh.pop %v793
      %v854 = vtanh.pop %v796
      %v855 = vtanh.pop %v801
      %v856 = vtanh.pop %v804
      %v857 = vtanh.pop %v809
      %v858 = vtanh.pop %v812
      %v859 = vtanh.pop %v817
      %v860 = vtanh.pop %v820
      %v861 = vtanh.pop %v825
      %v862 = vtanh.pop %v828
      %v863 = vpack.c.bf16 %v832, %v831
      %v864 = vpack.c.bf16 %v834, %v833
      %v865 = vpack.c.bf16 %v836, %v835
      %v866 = vpack.c.bf16 %v838, %v837
      %v867 = vpack.c.bf16 %v840, %v839
      %v868 = vpack.c.bf16 %v842, %v841
      %v869 = vpack.c.bf16 %v844, %v843
      %v870 = vpack.c.bf16 %v846, %v845
      %v871 = vpack.c.bf16 %v848, %v847
      %v872 = vpack.c.bf16 %v850, %v849
      %v873 = vpack.c.bf16 %v852, %v851
      %v874 = vpack.c.bf16 %v854, %v853
      %v875 = vpack.c.bf16 %v856, %v855
      %v876 = vpack.c.bf16 %v858, %v857
      %v877 = vpack.c.bf16 %v860, %v859
      %v878 = vpack.c.bf16 %v862, %v861
      %s879 = scalar_lea.vmem %s3, 64
      %v880 = vld [vmem:[%s879] sm:$0xf]
      %v881 = vld [vmem:[%s879 + $0x4] sm:$0xf]
      %v882 = vld [vmem:[%s879 + $0x8] sm:$0xf]
      %v883 = vld [vmem:[%s879 + $0xc] sm:$0xf]
      %v884 = vld [vmem:[%s879 + $0x10] sm:$0xf]
      %v885 = vld [vmem:[%s879 + $0x14] sm:$0xf]
      %v886 = vld [vmem:[%s879 + $0x18] sm:$0xf]
      %v887 = vld [vmem:[%s879 + $0x1c] sm:$0xf]
      %v888 = vld [vmem:[%s879 + $0x20] sm:$0xf]
      %v889 = vld [vmem:[%s879 + $0x24] sm:$0xf]
      %v890 = vld [vmem:[%s879 + $0x28] sm:$0xf]
      %v891 = vld [vmem:[%s879 + $0x2c] sm:$0xf]
      %v892 = vld [vmem:[%s879 + $0x30] sm:$0xf]
      %v893 = vld [vmem:[%s879 + $0x34] sm:$0xf]
      %v894 = vld [vmem:[%s879 + $0x38] sm:$0xf]
      %v895 = vld [vmem:[%s879 + $0x3c] sm:$0xf]
      %v896 = vld [vmem:[%s4 + $0x1] sm:$0x1]
      %v897 = vlaneseq
      %v898 = vshrl.u32 %v897, 7
      %v899 = vsub.s32 0, %v898
      %v900 = vrot.slane %v896, %v899
      %v917 = vunpack.c.l.b16 %v880
      %v918 = vunpack.c.l.b16 %v881
      %v919 = vunpack.c.l.b16 %v882
      %v920 = vunpack.c.l.b16 %v883
      %v921 = vunpack.c.l.b16 %v884
      %v922 = vunpack.c.l.b16 %v885
      %v923 = vunpack.c.l.b16 %v886
      %v924 = vunpack.c.l.b16 %v887
      %v925 = vunpack.c.l.b16 %v888
      %v926 = vunpack.c.l.b16 %v889
      %v927 = vunpack.c.l.b16 %v890
      %v928 = vunpack.c.l.b16 %v891
      %v929 = vunpack.c.l.b16 %v892
      %v930 = vunpack.c.l.b16 %v893
      %v931 = vunpack.c.l.b16 %v894
      %v932 = vunpack.c.l.b16 %v895
      %v933 = vpack.c.b16 %v918, %v917
      %v934 = vpack.c.b16 %v920, %v919
      %v935 = vpack.c.b16 %v922, %v921
      %v936 = vpack.c.b16 %v924, %v923
      %v937 = vpack.c.b16 %v926, %v925
      %v938 = vpack.c.b16 %v928, %v927
      %v939 = vpack.c.b16 %v930, %v929
      %v940 = vpack.c.b16 %v932, %v931
      %949 = vmatprep.subr.bf16.mxu0 0
      %950 = vmatpush1.bf16.msra.mxu0 %v933
      %951 = vmatprep.subr.bf16.mxu0 0
      %952 = vmatpush1.bf16.msra.mxu0 %v934
      %953 = vmatprep.subr.bf16.mxu0 0
      %954 = vmatpush1.bf16.msra.mxu0 %v935
      %955 = vmatprep.subr.bf16.mxu0 0
      %956 = vmatpush1.bf16.msra.mxu0 %v936
      %957 = vmatprep.subr.bf16.mxu0 0
      %958 = vmatpush1.bf16.msra.mxu0 %v937
      %959 = vmatprep.subr.bf16.mxu0 0
      %960 = vmatpush1.bf16.msra.mxu0 %v938
      %961 = vmatprep.subr.bf16.mxu0 0
      %962 = vmatpush1.bf16.msra.mxu0 %v939
      %963 = vmatprep.subr.bf16.mxu0 0
      %964 = vmatpush1.bf16.msra.mxu0 %v940
      %965 = vmatprep.subr.bf16.mxu0 0
      %966 = vmatpush1.bf16.msra.mxu0 0
      %967 = vmatprep.subr.bf16.mxu0 0
      %968 = vmatpush1.bf16.msra.mxu0 0
      %969 = vmatprep.subr.bf16.mxu0 0
      %970 = vmatpush1.bf16.msra.mxu0 0
      %971 = vmatprep.subr.bf16.mxu0 0
      %972 = vmatpush1.bf16.msra.mxu0 0
      %973 = vmatprep.subr.bf16.mxu0 0
      %974 = vmatpush1.bf16.msra.mxu0 0
      %975 = vmatprep.subr.bf16.mxu0 0
      %976 = vmatpush1.bf16.msra.mxu0 0
      %977 = vmatprep.subr.bf16.mxu0 0
      %978 = vmatpush1.bf16.msra.mxu0 0
      %979 = vmatprep.subr.bf16.mxu0 0
      %980 = vmatpush1.bf16.msra.mxu0 0
      %981 = vmatprep.mubr.bf16.mxu0 0
      %982 = vmatmul.mubr.bf16.gmra.mrb[0].mxu0 %v863
      %v983 = vpop.f32.mrb[0].mxu0
      %v984 = vadd.f32 %v900, %v983
      %v985 = vpop.f32.mrb[0].mxu0
      %v986 = vpop.f32.mrb[0].mxu0
      %v987 = vadd.f32 %v900, %v986
      %v988 = vpop.f32.mrb[0].mxu0
      %989 = vmatprep.mubr.bf16.mxu0 0
      %990 = vmatmul.mubr.bf16.gmra.mrb[0].mxu0 %v864
      %v991 = vpop.f32.mrb[0].mxu0
      %v992 = vadd.f32 %v900, %v991
      %v993 = vpop.f32.mrb[0].mxu0
      %v994 = vpop.f32.mrb[0].mxu0
      %v995 = vadd.f32 %v900, %v994
      %v996 = vpop.f32.mrb[0].mxu0
      %997 = vmatprep.mubr.bf16.mxu0 0
      %998 = vmatmul.mubr.bf16.gmra.mrb[0].mxu0 %v865
      %v999 = vpop.f32.mrb[0].mxu0
      %v1000 = vadd.f32 %v900, %v999
      %v1001 = vpop.f32.mrb[0].mxu0
      %v1002 = vpop.f32.mrb[0].mxu0
      %v1003 = vadd.f32 %v900, %v1002
      %v1004 = vpop.f32.mrb[0].mxu0
      %1005 = vmatprep.mubr.bf16.mxu0 0
      %1006 = vmatmul.mubr.bf16.gmra.mrb[0].mxu0 %v866
      %v1007 = vpop.f32.mrb[0].mxu0
      %v1008 = vadd.f32 %v900, %v1007
      %v1009 = vpop.f32.mrb[0].mxu0
      %v1010 = vpop.f32.mrb[0].mxu0
      %v1011 = vadd.f32 %v900, %v1010
      %v1012 = vpop.f32.mrb[0].mxu0
      %1013 = vmatprep.mubr.bf16.mxu0 0
      %1014 = vmatmul.mubr.bf16.gmra.mrb[0].mxu0 %v867
      %v1015 = vpop.f32.mrb[0].mxu0
      %v1016 = vadd.f32 %v900, %v1015
      %v1017 = vpop.f32.mrb[0].mxu0
      %v1018 = vpop.f32.mrb[0].mxu0
      %v1019 = vadd.f32 %v900, %v1018
      %v1020 = vpop.f32.mrb[0].mxu0
      %1021 = vmatprep.mubr.bf16.mxu0 0
      %1022 = vmatmul.mubr.bf16.gmra.mrb[0].mxu0 %v868
      %v1023 = vpop.f32.mrb[0].mxu0
      %v1024 = vadd.f32 %v900, %v1023
      %v1025 = vpop.f32.mrb[0].mxu0
      %v1026 = vpop.f32.mrb[0].mxu0
      %v1027 = vadd.f32 %v900, %v1026
      %v1028 = vpop.f32.mrb[0].mxu0
      %1029 = vmatprep.mubr.bf16.mxu0 0
      %1030 = vmatmul.mubr.bf16.gmra.mrb[0].mxu0 %v869
      %v1031 = vpop.f32.mrb[0].mxu0
      %v1032 = vadd.f32 %v900, %v1031
      %v1033 = vpop.f32.mrb[0].mxu0
      %v1034 = vpop.f32.mrb[0].mxu0
      %v1035 = vadd.f32 %v900, %v1034
      %v1036 = vpop.f32.mrb[0].mxu0
      %1037 = vmatprep.mubr.bf16.mxu0 0
      %1038 = vmatmul.mubr.bf16.gmra.mrb[0].mxu0 %v870
      %v1039 = vpop.f32.mrb[0].mxu0
      %v1040 = vadd.f32 %v900, %v1039
      %v1041 = vpop.f32.mrb[0].mxu0
      %v1042 = vpop.f32.mrb[0].mxu0
      %v1043 = vadd.f32 %v900, %v1042
      %v1044 = vpop.f32.mrb[0].mxu0
      %1045 = vmatprep.mubr.bf16.mxu0 0
      %1046 = vmatmul.mubr.bf16.gmra.mrb[0].mxu0 %v871
      %v1047 = vpop.f32.mrb[0].mxu0
      %v1048 = vadd.f32 %v900, %v1047
      %v1049 = vpop.f32.mrb[0].mxu0
      %v1050 = vpop.f32.mrb[0].mxu0
      %v1051 = vadd.f32 %v900, %v1050
      %v1052 = vpop.f32.mrb[0].mxu0
      %1053 = vmatprep.mubr.bf16.mxu0 0
      %1054 = vmatmul.mubr.bf16.gmra.mrb[0].mxu0 %v872
      %v1055 = vpop.f32.mrb[0].mxu0
      %v1056 = vadd.f32 %v900, %v1055
      %v1057 = vpop.f32.mrb[0].mxu0
      %v1058 = vpop.f32.mrb[0].mxu0
      %v1059 = vadd.f32 %v900, %v1058
      %v1060 = vpop.f32.mrb[0].mxu0
      %1061 = vmatprep.mubr.bf16.mxu0 0
      %1062 = vmatmul.mubr.bf16.gmra.mrb[0].mxu0 %v873
      %v1063 = vpop.f32.mrb[0].mxu0
      %v1064 = vadd.f32 %v900, %v1063
      %v1065 = vpop.f32.mrb[0].mxu0
      %v1066 = vpop.f32.mrb[0].mxu0
      %v1067 = vadd.f32 %v900, %v1066
      %v1068 = vpop.f32.mrb[0].mxu0
      %1069 = vmatprep.mubr.bf16.mxu0 0
      %1070 = vmatmul.mubr.bf16.gmra.mrb[0].mxu0 %v874
      %v1071 = vpop.f32.mrb[0].mxu0
      %v1072 = vadd.f32 %v900, %v1071
      %v1073 = vpop.f32.mrb[0].mxu0
      %v1074 = vpop.f32.mrb[0].mxu0
      %v1075 = vadd.f32 %v900, %v1074
      %v1076 = vpop.f32.mrb[0].mxu0
      %1077 = vmatprep.mubr.bf16.mxu0 0
      %1078 = vmatmul.mubr.bf16.gmra.mrb[0].mxu0 %v875
      %v1079 = vpop.f32.mrb[0].mxu0
      %v1080 = vadd.f32 %v900, %v1079
      %v1081 = vpop.f32.mrb[0].mxu0
      %v1082 = vpop.f32.mrb[0].mxu0
      %v1083 = vadd.f32 %v900, %v1082
      %v1084 = vpop.f32.mrb[0].mxu0
      %1085 = vmatprep.mubr.bf16.mxu0 0
      %1086 = vmatmul.mubr.bf16.gmra.mrb[0].mxu0 %v876
      %v1087 = vpop.f32.mrb[0].mxu0
      %v1088 = vadd.f32 %v900, %v1087
      %v1089 = vpop.f32.mrb[0].mxu0
      %v1090 = vpop.f32.mrb[0].mxu0
      %v1091 = vadd.f32 %v900, %v1090
      %v1092 = vpop.f32.mrb[0].mxu0
      %1093 = vmatprep.mubr.bf16.mxu0 0
      %1094 = vmatmul.mubr.bf16.gmra.mrb[0].mxu0 %v877
      %v1095 = vpop.f32.mrb[0].mxu0
      %v1096 = vadd.f32 %v900, %v1095
      %v1097 = vpop.f32.mrb[0].mxu0
      %v1098 = vpop.f32.mrb[0].mxu0
      %v1099 = vadd.f32 %v900, %v1098
      %v1100 = vpop.f32.mrb[0].mxu0
      %1101 = vmatprep.mubr.bf16.mxu0 0
      %1102 = vmatmul.mubr.bf16.gmra.mrb[0].mxu0 %v878
      %v1103 = vpop.f32.mrb[0].mxu0
      %v1104 = vadd.f32 %v900, %v1103
      %v1105 = vpop.f32.mrb[0].mxu0
      %v1106 = vpop.f32.mrb[0].mxu0
      %v1107 = vadd.f32 %v900, %v1106
      %v1108 = vpop.f32.mrb[0].mxu0
      %1109 = vdwg.mxu0
      %v1110 = vtanh.pop %v984
      %v1111 = vtanh.pop %v987
      %v1112 = vtanh.pop %v992
      %v1113 = vtanh.pop %v995
      %v1114 = vtanh.pop %v1000
      %v1115 = vtanh.pop %v1003
      %v1116 = vtanh.pop %v1008
      %v1117 = vtanh.pop %v1011
      %v1118 = vtanh.pop %v1016
      %v1119 = vtanh.pop %v1019
      %v1120 = vtanh.pop %v1024
      %v1121 = vtanh.pop %v1027
      %v1122 = vtanh.pop %v1032
      %v1123 = vtanh.pop %v1035
      %v1124 = vtanh.pop %v1040
      %v1125 = vtanh.pop %v1043
      %v1126 = vtanh.pop %v1048
      %v1127 = vtanh.pop %v1051
      %v1128 = vtanh.pop %v1056
      %v1129 = vtanh.pop %v1059
      %v1130 = vtanh.pop %v1064
      %v1131 = vtanh.pop %v1067
      %v1132 = vtanh.pop %v1072
      %v1133 = vtanh.pop %v1075
      %v1134 = vtanh.pop %v1080
      %v1135 = vtanh.pop %v1083
      %v1136 = vtanh.pop %v1088
      %v1137 = vtanh.pop %v1091
      %v1138 = vtanh.pop %v1096
      %v1139 = vtanh.pop %v1099
      %v1140 = vtanh.pop %v1104
      %v1141 = vtanh.pop %v1107
      %v1142 = vpack.c.bf16 %v1111, %v1110
      %v1143 = vpack.c.bf16 %v1113, %v1112
      %v1144 = vpack.c.bf16 %v1115, %v1114
      %v1145 = vpack.c.bf16 %v1117, %v1116
      %v1146 = vpack.c.bf16 %v1119, %v1118
      %v1147 = vpack.c.bf16 %v1121, %v1120
      %v1148 = vpack.c.bf16 %v1123, %v1122
      %v1149 = vpack.c.bf16 %v1125, %v1124
      %v1150 = vpack.c.bf16 %v1127, %v1126
      %v1151 = vpack.c.bf16 %v1129, %v1128
      %v1152 = vpack.c.bf16 %v1131, %v1130
      %v1153 = vpack.c.bf16 %v1133, %v1132
      %v1154 = vpack.c.bf16 %v1135, %v1134
      %v1155 = vpack.c.bf16 %v1137, %v1136
      %v1156 = vpack.c.bf16 %v1139, %v1138
      %v1157 = vpack.c.bf16 %v1141, %v1140
      %v1158 = vld [vmem:[%s5] sm:$0xf]
      %v1159 = vld [vmem:[%s5 + $0x4] sm:$0xf]
      %v1160 = vld [vmem:[%s5 + $0x8] sm:$0xf]
      %v1161 = vld [vmem:[%s5 + $0xc] sm:$0xf]
      %v1162 = vld [vmem:[%s5 + $0x10] sm:$0xf]
      %v1163 = vld [vmem:[%s5 + $0x14] sm:$0xf]
      %v1164 = vld [vmem:[%s5 + $0x18] sm:$0xf]
      %v1165 = vld [vmem:[%s5 + $0x1c] sm:$0xf]
      %v1166 = vld [vmem:[%s5 + $0x20] sm:$0xf]
      %v1167 = vld [vmem:[%s5 + $0x24] sm:$0xf]
      %v1168 = vld [vmem:[%s5 + $0x28] sm:$0xf]
      %v1169 = vld [vmem:[%s5 + $0x2c] sm:$0xf]
      %v1170 = vld [vmem:[%s5 + $0x30] sm:$0xf]
      %v1171 = vld [vmem:[%s5 + $0x34] sm:$0xf]
      %v1172 = vld [vmem:[%s5 + $0x38] sm:$0xf]
      %v1173 = vld [vmem:[%s5 + $0x3c] sm:$0xf]
      %v1174 = vld [vmem:[%s6] sm:$0x1]
      %v1176 = vlaneseq
      %v1177 = vshrl.u32 %v1176, 7
      %v1178 = vsub.s32 0, %v1177
      %v1179 = vrot.slane %v1174, %v1178
      %v1197 = vunpack.c.l.b16 %v1158
      %v1198 = vunpack.c.l.b16 %v1159
      %v1199 = vunpack.c.l.b16 %v1160
      %v1200 = vunpack.c.l.b16 %v1161
      %v1201 = vunpack.c.l.b16 %v1162
      %v1202 = vunpack.c.l.b16 %v1163
      %v1203 = vunpack.c.l.b16 %v1164
      %v1204 = vunpack.c.l.b16 %v1165
      %v1205 = vunpack.c.l.b16 %v1166
      %v1206 = vunpack.c.l.b16 %v1167
      %v1207 = vunpack.c.l.b16 %v1168
      %v1208 = vunpack.c.l.b16 %v1169
      %v1209 = vunpack.c.l.b16 %v1170
      %v1210 = vunpack.c.l.b16 %v1171
      %v1211 = vunpack.c.l.b16 %v1172
      %v1212 = vunpack.c.l.b16 %v1173
      %v1213 = vpack.c.b16 %v1198, %v1197
      %v1214 = vpack.c.b16 %v1200, %v1199
      %v1215 = vpack.c.b16 %v1202, %v1201
      %v1216 = vpack.c.b16 %v1204, %v1203
      %v1217 = vpack.c.b16 %v1206, %v1205
      %v1218 = vpack.c.b16 %v1208, %v1207
      %v1219 = vpack.c.b16 %v1210, %v1209
      %v1220 = vpack.c.b16 %v1212, %v1211
      %1229 = vmatprep.subr.bf16.mxu0 0
      %1230 = vmatpush1.bf16.msra.mxu0 %v1213
      %1231 = vmatprep.subr.bf16.mxu0 0
      %1232 = vmatpush1.bf16.msra.mxu0 %v1214
      %1233 = vmatprep.subr.bf16.mxu0 0
      %1234 = vmatpush1.bf16.msra.mxu0 %v1215
      %1235 = vmatprep.subr.bf16.mxu0 0
      %1236 = vmatpush1.bf16.msra.mxu0 %v1216
      %1237 = vmatprep.subr.bf16.mxu0 0
      %1238 = vmatpush1.bf16.msra.mxu0 %v1217
      %1239 = vmatprep.subr.bf16.mxu0 0
      %1240 = vmatpush1.bf16.msra.mxu0 %v1218
      %1241 = vmatprep.subr.bf16.mxu0 0
      %1242 = vmatpush1.bf16.msra.mxu0 %v1219
      %1243 = vmatprep.subr.bf16.mxu0 0
      %1244 = vmatpush1.bf16.msra.mxu0 %v1220
      %1245 = vmatprep.subr.bf16.mxu0 0
      %1246 = vmatpush1.bf16.msra.mxu0 0
      %1247 = vmatprep.subr.bf16.mxu0 0
      %1248 = vmatpush1.bf16.msra.mxu0 0
      %1249 = vmatprep.subr.bf16.mxu0 0
      %1250 = vmatpush1.bf16.msra.mxu0 0
      %1251 = vmatprep.subr.bf16.mxu0 0
      %1252 = vmatpush1.bf16.msra.mxu0 0
      %1253 = vmatprep.subr.bf16.mxu0 0
      %1254 = vmatpush1.bf16.msra.mxu0 0
      %1255 = vmatprep.subr.bf16.mxu0 0
      %1256 = vmatpush1.bf16.msra.mxu0 0
      %1257 = vmatprep.subr.bf16.mxu0 0
      %1258 = vmatpush1.bf16.msra.mxu0 0
      %1259 = vmatprep.subr.bf16.mxu0 0
      %1260 = vmatpush1.bf16.msra.mxu0 0
      %1261 = vmatprep.mubr.bf16.mxu0 0
      %1262 = vmatmul.mubr.bf16.gmra.mrb[0].mxu0 %v1142
      %v1263 = vpop.f32.mrb[0].mxu0
      %v1264 = vadd.f32 %v1179, %v1263
      %v1265 = vpop.f32.mrb[0].mxu0
      %v1266 = vpop.f32.mrb[0].mxu0
      %v1267 = vadd.f32 %v1179, %v1266
      %v1268 = vpop.f32.mrb[0].mxu0
      %1269 = vmatprep.mubr.bf16.mxu0 0
      %1270 = vmatmul.mubr.bf16.gmra.mrb[0].mxu0 %v1143
      %v1271 = vpop.f32.mrb[0].mxu0
      %v1272 = vadd.f32 %v1179, %v1271
      %v1273 = vpop.f32.mrb[0].mxu0
      %v1274 = vpop.f32.mrb[0].mxu0
      %v1275 = vadd.f32 %v1179, %v1274
      %v1276 = vpop.f32.mrb[0].mxu0
      %1277 = vmatprep.mubr.bf16.mxu0 0
      %1278 = vmatmul.mubr.bf16.gmra.mrb[0].mxu0 %v1144
      %v1279 = vpop.f32.mrb[0].mxu0
      %v1280 = vadd.f32 %v1179, %v1279
      %v1281 = vpop.f32.mrb[0].mxu0
      %v1282 = vpop.f32.mrb[0].mxu0
      %v1283 = vadd.f32 %v1179, %v1282
      %v1284 = vpop.f32.mrb[0].mxu0
      %1285 = vmatprep.mubr.bf16.mxu0 0
      %1286 = vmatmul.mubr.bf16.gmra.mrb[0].mxu0 %v1145
      %v1287 = vpop.f32.mrb[0].mxu0
      %v1288 = vadd.f32 %v1179, %v1287
      %v1289 = vpop.f32.mrb[0].mxu0
      %v1290 = vpop.f32.mrb[0].mxu0
      %v1291 = vadd.f32 %v1179, %v1290
      %v1292 = vpop.f32.mrb[0].mxu0
      %1293 = vmatprep.mubr.bf16.mxu0 0
      %1294 = vmatmul.mubr.bf16.gmra.mrb[0].mxu0 %v1146
      %v1295 = vpop.f32.mrb[0].mxu0
      %v1296 = vadd.f32 %v1179, %v1295
      %v1297 = vpop.f32.mrb[0].mxu0
      %v1298 = vpop.f32.mrb[0].mxu0
      %v1299 = vadd.f32 %v1179, %v1298
      %v1300 = vpop.f32.mrb[0].mxu0
      %1301 = vmatprep.mubr.bf16.mxu0 0
      %1302 = vmatmul.mubr.bf16.gmra.mrb[0].mxu0 %v1147
      %v1303 = vpop.f32.mrb[0].mxu0
      %v1304 = vadd.f32 %v1179, %v1303
      %v1305 = vpop.f32.mrb[0].mxu0
      %v1306 = vpop.f32.mrb[0].mxu0
      %v1307 = vadd.f32 %v1179, %v1306
      %v1308 = vpop.f32.mrb[0].mxu0
      %1309 = vmatprep.mubr.bf16.mxu0 0
      %1310 = vmatmul.mubr.bf16.gmra.mrb[0].mxu0 %v1148
      %v1311 = vpop.f32.mrb[0].mxu0
      %v1312 = vadd.f32 %v1179, %v1311
      %v1313 = vpop.f32.mrb[0].mxu0
      %v1314 = vpop.f32.mrb[0].mxu0
      %v1315 = vadd.f32 %v1179, %v1314
      %v1316 = vpop.f32.mrb[0].mxu0
      %1317 = vmatprep.mubr.bf16.mxu0 0
      %1318 = vmatmul.mubr.bf16.gmra.mrb[0].mxu0 %v1149
      %v1319 = vpop.f32.mrb[0].mxu0
      %v1320 = vadd.f32 %v1179, %v1319
      %v1321 = vpop.f32.mrb[0].mxu0
      %v1322 = vpop.f32.mrb[0].mxu0
      %v1323 = vadd.f32 %v1179, %v1322
      %v1324 = vpop.f32.mrb[0].mxu0
      %1325 = vmatprep.mubr.bf16.mxu0 0
      %1326 = vmatmul.mubr.bf16.gmra.mrb[0].mxu0 %v1150
      %v1327 = vpop.f32.mrb[0].mxu0
      %v1328 = vadd.f32 %v1179, %v1327
      %v1329 = vpop.f32.mrb[0].mxu0
      %v1330 = vpop.f32.mrb[0].mxu0
      %v1331 = vadd.f32 %v1179, %v1330
      %v1332 = vpop.f32.mrb[0].mxu0
      %1333 = vmatprep.mubr.bf16.mxu0 0
      %1334 = vmatmul.mubr.bf16.gmra.mrb[0].mxu0 %v1151
      %v1335 = vpop.f32.mrb[0].mxu0
      %v1336 = vadd.f32 %v1179, %v1335
      %v1337 = vpop.f32.mrb[0].mxu0
      %v1338 = vpop.f32.mrb[0].mxu0
      %v1339 = vadd.f32 %v1179, %v1338
      %v1340 = vpop.f32.mrb[0].mxu0
      %1341 = vmatprep.mubr.bf16.mxu0 0
      %1342 = vmatmul.mubr.bf16.gmra.mrb[0].mxu0 %v1152
      %v1343 = vpop.f32.mrb[0].mxu0
      %v1344 = vadd.f32 %v1179, %v1343
      %v1345 = vpop.f32.mrb[0].mxu0
      %v1346 = vpop.f32.mrb[0].mxu0
      %v1347 = vadd.f32 %v1179, %v1346
      %v1348 = vpop.f32.mrb[0].mxu0
      %1349 = vmatprep.mubr.bf16.mxu0 0
      %1350 = vmatmul.mubr.bf16.gmra.mrb[0].mxu0 %v1153
      %v1351 = vpop.f32.mrb[0].mxu0
      %v1352 = vadd.f32 %v1179, %v1351
      %v1353 = vpop.f32.mrb[0].mxu0
      %v1354 = vpop.f32.mrb[0].mxu0
      %v1355 = vadd.f32 %v1179, %v1354
      %v1356 = vpop.f32.mrb[0].mxu0
      %1357 = vmatprep.mubr.bf16.mxu0 0
      %1358 = vmatmul.mubr.bf16.gmra.mrb[0].mxu0 %v1154
      %v1359 = vpop.f32.mrb[0].mxu0
      %v1360 = vadd.f32 %v1179, %v1359
      %v1361 = vpop.f32.mrb[0].mxu0
      %v1362 = vpop.f32.mrb[0].mxu0
      %v1363 = vadd.f32 %v1179, %v1362
      %v1364 = vpop.f32.mrb[0].mxu0
      %1365 = vmatprep.mubr.bf16.mxu0 0
      %1366 = vmatmul.mubr.bf16.gmra.mrb[0].mxu0 %v1155
      %v1367 = vpop.f32.mrb[0].mxu0
      %v1368 = vadd.f32 %v1179, %v1367
      %v1369 = vpop.f32.mrb[0].mxu0
      %v1370 = vpop.f32.mrb[0].mxu0
      %v1371 = vadd.f32 %v1179, %v1370
      %v1372 = vpop.f32.mrb[0].mxu0
      %1373 = vmatprep.mubr.bf16.mxu0 0
      %1374 = vmatmul.mubr.bf16.gmra.mrb[0].mxu0 %v1156
      %v1375 = vpop.f32.mrb[0].mxu0
      %v1376 = vadd.f32 %v1179, %v1375
      %v1377 = vpop.f32.mrb[0].mxu0
      %v1378 = vpop.f32.mrb[0].mxu0
      %v1379 = vadd.f32 %v1179, %v1378
      %v1380 = vpop.f32.mrb[0].mxu0
      %1381 = vmatprep.mubr.bf16.mxu0 0
      %1382 = vmatmul.mubr.bf16.gmra.mrb[0].mxu0 %v1157
      %v1383 = vpop.f32.mrb[0].mxu0
      %v1384 = vadd.f32 %v1179, %v1383
      %v1385 = vpop.f32.mrb[0].mxu0
      %v1386 = vpop.f32.mrb[0].mxu0
      %v1387 = vadd.f32 %v1179, %v1386
      %v1388 = vpop.f32.mrb[0].mxu0
      %1389 = vdwg.mxu0
      %vm1390 = vcmask 64512
      %1391 = vst.msk [vmem:[%s280] sm:$0xff] %vm1390, %v1264
      %1392 = vst.msk [vmem:[%s280 + $0x8] sm:$0xff] %vm1390, %v1267
      %1393 = vst.msk [vmem:[%s280 + $0x10] sm:$0xff] %vm1390, %v1272
      %1394 = vst.msk [vmem:[%s280 + $0x18] sm:$0xff] %vm1390, %v1275
      %1395 = vst.msk [vmem:[%s280 + $0x20] sm:$0xff] %vm1390, %v1280
      %1396 = vst.msk [vmem:[%s280 + $0x28] sm:$0xff] %vm1390, %v1283
      %1397 = vst.msk [vmem:[%s280 + $0x30] sm:$0xff] %vm1390, %v1288
      %1398 = vst.msk [vmem:[%s280 + $0x38] sm:$0xff] %vm1390, %v1291
      %1399 = vst.msk [vmem:[%s280 + $0x40] sm:$0xff] %vm1390, %v1296
      %1400 = vst.msk [vmem:[%s280 + $0x48] sm:$0xff] %vm1390, %v1299
      %1401 = vst.msk [vmem:[%s280 + $0x50] sm:$0xff] %vm1390, %v1304
      %1402 = vst.msk [vmem:[%s280 + $0x58] sm:$0xff] %vm1390, %v1307
      %1403 = vst.msk [vmem:[%s280 + $0x60] sm:$0xff] %vm1390, %v1312
      %1404 = vst.msk [vmem:[%s280 + $0x68] sm:$0xff] %vm1390, %v1315
      %1405 = vst.msk [vmem:[%s280 + $0x70] sm:$0xff] %vm1390, %v1320
      %1406 = vst.msk [vmem:[%s280 + $0x78] sm:$0xff] %vm1390, %v1323
      %1407 = vst.msk [vmem:[%s280 + $0x80] sm:$0xff] %vm1390, %v1328
      %1408 = vst.msk [vmem:[%s280 + $0x88] sm:$0xff] %vm1390, %v1331
      %1409 = vst.msk [vmem:[%s280 + $0x90] sm:$0xff] %vm1390, %v1336
      %1410 = vst.msk [vmem:[%s280 + $0x98] sm:$0xff] %vm1390, %v1339
      %1411 = vst.msk [vmem:[%s280 + $0xa0] sm:$0xff] %vm1390, %v1344
      %1412 = vst.msk [vmem:[%s280 + $0xa8] sm:$0xff] %vm1390, %v1347
      %1413 = vst.msk [vmem:[%s280 + $0xb0] sm:$0xff] %vm1390, %v1352
      %1414 = vst.msk [vmem:[%s280 + $0xb8] sm:$0xff] %vm1390, %v1355
      %1415 = vst.msk [vmem:[%s280 + $0xc0] sm:$0xff] %vm1390, %v1360
      %1416 = vst.msk [vmem:[%s280 + $0xc8] sm:$0xff] %vm1390, %v1363
      %1417 = vst.msk [vmem:[%s280 + $0xd0] sm:$0xff] %vm1390, %v1368
      %1418 = vst.msk [vmem:[%s280 + $0xd8] sm:$0xff] %vm1390, %v1371
      %1419 = vst.msk [vmem:[%s280 + $0xe0] sm:$0xff] %vm1390, %v1376
      %1420 = vst.msk [vmem:[%s280 + $0xe8] sm:$0xff] %vm1390, %v1379
      %1421 = vst.msk [vmem:[%s280 + $0xf0] sm:$0xff] %vm1390, %v1384
      %1422 = vst.msk [vmem:[%s280 + $0xf8] sm:$0xff] %vm1390, %v1387
      %s1423 = smul.u32 32, %s18
      %p1424 = scmp.lt.s32.totalorder %s1423, 63
      %s1425 = scalar_select %p1424, %s1423, 63
      %s1426 = smul.addr %s1425, 8
      %s1427 = scalar_lea.vmem %s7, %s1426
      // Predicated region
      $region49: #{tpu_custom_call.1} parent=47 // pred_check
        %p1428 = pneg %p188
      $region50: #{tpu_custom_call.1} parent=47 // pred_check_branch
        %1430 = sbr.rel (%p1428) target = $region52
      $region51: #{tpu_custom_call.1} parent=47 // pred_region
        %s1431 = smul.u32 32, %s18
      $region52: #{tpu_custom_call.1} parent=47 // pred_fallthru
        _
    $region48: #{tpu_custom_call.1} parent=5 // pred_fallthru
      _
    %p1432 = scmp.le.s32.totalorder 2, %s13
    // Predicated region
    $region53: #{tpu_custom_call.1} parent=5 // pred_check
      %p1433 = pneg %p1432
    $region54: #{tpu_custom_call.1} parent=5 // pred_check_branch
      %1435 = sbr.rel (%p1433) target = $region56
    $region55: #{tpu_custom_call.1} parent=5 // pred_region
      %s1436 = ssub.s32 %s13, 2
      // Predicated region
      $region57: #{tpu_custom_call.1} parent=55 // pred_check
        %p1437 = pneg %p194
      $region58: #{tpu_custom_call.1} parent=55 // pred_check_branch
        %1439 = sbr.rel (%p1437) target = $region60
      $region59: #{tpu_custom_call.1} parent=55 // pred_region
        %s1440 = smul.u32 32, %s19
        %p1441 = scmp.lt.s32.totalorder %s1440, 63
        %s1442 = scalar_select %p1441, %s1440, 63
        %s1443 = smul.addr %s1442, 8
        %s1444 = scalar_lea.vmem %s7, %s1443
      $region60: #{tpu_custom_call.1} parent=55 // pred_fallthru
        _
    $region56: #{tpu_custom_call.1} parent=5 // pred_fallthru
      _
  $region6: #{tpu_custom_call.1} parent=0 // loop_footer
    %s17 = sadd.s32 1, %s13
  $region7: #{tpu_custom_call.1} parent=0 // loop_footer_branch
    %12 = sbr.rel target = $region3
  $region8: #{tpu_custom_call.1} parent=0 // loop_exit
    _

</llo_original>
